<compile_context>
chip_gen: v6e
topology: v6e:2x2x1
jax: 0.10.0
libtpu: 0.0.40
codegen_flags: <defaults>
</compile_context>

<pallas_src>
import jax
import jax.numpy as jnp
from jax import lax
from jax.experimental import pallas as pl
from jax.experimental.pallas import tpu as pltpu


# Matmul-input dtype.  jnp.float32 is bit-safe everywhere; set to
# jnp.bfloat16 on v6e/v7x for 2x MXU rate (accumulation stays f32, bias/ReLU
# epilogue stays f32).
_MXU_DTYPE = jnp.float32


def _round_up(x, m):
    return (x + m - 1) // m * m


def _pad2d(a, rows, cols):
    return jnp.pad(a, ((0, rows - a.shape[0]), (0, cols - a.shape[1])))


# ----------------------------- Pallas kernels ------------------------------

def _conv_relu_pool_kernel(x0_ref, x1_ref, x2_ref, x3_ref, w_ref, b_ref, o_ref):
    """Fused conv(im2col matmul) + bias + ReLU + 2x2 max-pool.

    x{0..3}_ref: (tm, Kp) im2col slabs, one per pool-window offset.
    w_ref: (Kp, Cp) weights; b_ref: (1, Cp) bias; o_ref: (tm, Cp) pooled out.
    """
    w = w_ref[...]
    b = b_ref[...]

    def branch(x_ref):
        y = jnp.dot(x_ref[...], w, preferred_element_type=jnp.float32) + b
        return jnp.maximum(y, 0.0)

    o_ref[...] = jnp.maximum(jnp.maximum(branch(x0_ref), branch(x1_ref)),
                             jnp.maximum(branch(x2_ref), branch(x3_ref)))


def _mlp3_kernel(x_ref, w1_ref, b1_ref, w2_ref, b2_ref, w3_ref, b3_ref, o_ref):
    """Fused fc1(ReLU) -> fc2(ReLU) -> fc3.  All weights resident in VMEM."""
    h = jnp.dot(x_ref[...], w1_ref[...],
                preferred_element_type=jnp.float32) + b1_ref[...]
    h = jnp.maximum(h, 0.0).astype(w2_ref.dtype)
    h = jnp.dot(h, w2_ref[...],
                preferred_element_type=jnp.float32) + b2_ref[...]
    h = jnp.maximum(h, 0.0).astype(w3_ref.dtype)
    o_ref[...] = jnp.dot(h, w3_ref[...],
                         preferred_element_type=jnp.float32) + b3_ref[...]


# ----------------------- fused conv + ReLU + max-pool -----------------------

def conv_relu_pool_pallas(x_nhwc, w_oihw, b, *, tile_m=512):
    """VALID conv (stride 1) + ReLU + 2x2/stride-2 max-pool, one pallas_call."""
    N, H, W, Cin = x_nhwc.shape
    Cout, Cin_w, KH, KW = w_oihw.shape
    assert Cin == Cin_w
    OH, OW = H - KH + 1, W - KW + 1
    PH, PW = OH // 2, OW // 2                      # pooled spatial dims
    K = KH * KW * Cin
    Kp = _round_up(K, 128)                         # lane-dense contraction
    Cp = _round_up(Cout, 128)                      # lane-dense output

    # Weight as (KH*KW*Cin, Cout) with Cin innermost (matches NHWC patches).
    w2d = jnp.transpose(w_oihw, (2, 3, 1, 0)).reshape(K, Cout)
    w2d = _pad2d(w2d.astype(_MXU_DTYPE), Kp, Cp)
    b2 = jnp.pad(b.astype(jnp.float32), (0, Cp - Cout)).reshape(1, Cp)

    M = N * PH * PW
    tm = min(tile_m, _round_up(M, 8))
    Mp = _round_up(M, tm)

    def im2col(di, dj):
        # Row m = pooled position (n, ph, pw); patch taken at conv position
        # (2*ph + di, 2*pw + dj). Channel-innermost K layout, lane-contiguous.
        slabs = [x_nhwc[:, di + i: di + i + 2 * PH: 2,
                        dj + j: dj + j + 2 * PW: 2, :]
                 for i in range(KH) for j in range(KW)]
        p = jnp.concatenate(slabs, axis=-1)        # (N, PH, PW, KH*KW*Cin)
        p = p.reshape(M, K).astype(_MXU_DTYPE)
        return jnp.pad(p, ((0, Mp - M), (0, Kp - K)))

    xs = [im2col(di, dj) for di in (0, 1) for dj in (0, 1)]

    out = pl.pallas_call(
        _conv_relu_pool_kernel,
        out_shape=jax.ShapeDtypeStruct((Mp, Cp), jnp.float32),
        grid=(Mp // tm,),
        in_specs=[pl.BlockSpec((tm, Kp), lambda i: (i, 0))] * 4 + [
            pl.BlockSpec((Kp, Cp), lambda i: (0, 0)),
            pl.BlockSpec((1, Cp), lambda i: (0, 0)),
        ],
        out_specs=pl.BlockSpec((tm, Cp), lambda i: (i, 0)),
        compiler_params=pltpu.CompilerParams(
            dimension_semantics=("parallel",)),
    )(*xs, w2d, b2)

    return out[:M, :Cout].reshape(N, PH, PW, Cout)


# -------------------------- fused 3-layer MLP head ---------------------------

def mlp3_pallas(x, w1, b1, w2, b2, w3, b3, *, tile_m=512):
    """fc1(ReLU) + fc2(ReLU) + fc3 in one kernel; lane/K dims padded to 128."""
    M, K = x.shape
    Kp = _round_up(K, 128)                          # 400 -> 512
    H1, H2, NO = w1.shape[1], w2.shape[1], w3.shape[1]
    H1p, H2p, NOp = (_round_up(H1, 128), _round_up(H2, 128),
                     _round_up(NO, 128))
    tm = min(tile_m, _round_up(M, 8))
    Mp = _round_up(M, tm)

    xp = jnp.pad(x.astype(_MXU_DTYPE), ((0, Mp - M), (0, Kp - K)))
    w1p = _pad2d(w1.astype(_MXU_DTYPE), Kp, H1p)
    w2p = _pad2d(w2.astype(_MXU_DTYPE), H1p, H2p)
    w3p = _pad2d(w3.astype(_MXU_DTYPE), H2p, NOp)
    b1p = jnp.pad(b1.astype(jnp.float32), (0, H1p - H1)).reshape(1, H1p)
    b2p = jnp.pad(b2.astype(jnp.float32), (0, H2p - H2)).reshape(1, H2p)
    b3p = jnp.pad(b3.astype(jnp.float32), (0, NOp - NO)).reshape(1, NOp)

    out = pl.pallas_call(
        _mlp3_kernel,
        out_shape=jax.ShapeDtypeStruct((Mp, NOp), jnp.float32),
        grid=(Mp // tm,),
        in_specs=[
            pl.BlockSpec((tm, Kp), lambda i: (i, 0)),
            pl.BlockSpec((Kp, H1p), lambda i: (0, 0)),
            pl.BlockSpec((1, H1p), lambda i: (0, 0)),
            pl.BlockSpec((H1p, H2p), lambda i: (0, 0)),
            pl.BlockSpec((1, H2p), lambda i: (0, 0)),
            pl.BlockSpec((H2p, NOp), lambda i: (0, 0)),
            pl.BlockSpec((1, NOp), lambda i: (0, 0)),
        ],
        out_specs=pl.BlockSpec((tm, NOp), lambda i: (i, 0)),
        compiler_params=pltpu.CompilerParams(
            dimension_semantics=("parallel",)),
    )(xp, w1p, b1p, w2p, b2p, w3p, b3p)

    return out[:M, :NO]


# ------------------------------ full forward --------------------------------

def cnn_cifar10_forward(x_nchw, p):
    x = jnp.transpose(x_nchw, (0, 2, 3, 1))                    # NCHW -> NHWC
    x = conv_relu_pool_pallas(x, p["w1"], p["b1"])             # (N,14,14,6)
    x = conv_relu_pool_pallas(x, p["w2"], p["b2"])             # (N,5,5,16)
    N = x.shape[0]
    x = jnp.transpose(x, (0, 3, 1, 2)).reshape(N, 16 * 5 * 5)  # torch view order
    return mlp3_pallas(x, p["wf1"], p["bf1"], p["wf2"], p["bf2"],
                       p["wf3"], p["bf3"])                     # (N,10)


def init_params(key):
    """Deterministic init mimicking PyTorch's U(-1/sqrt(fan_in), 1/sqrt(fan_in))."""
    def u(k, shape, fan_in):
        bound = 1.0 / float(fan_in) ** 0.5
        return jax.random.uniform(k, shape, jnp.float32, -bound, bound)

    ks = jax.random.split(key, 10)
    return {
        "w1": u(ks[0], (6, 3, 5, 5), 3 * 25), "b1": u(ks[1], (6,), 3 * 25),
        "w2": u(ks[2], (16, 6, 5, 5), 6 * 25), "b2": u(ks[3], (16,), 6 * 25),
        "wf1": u(ks[4], (400, 120), 400), "bf1": u(ks[5], (120,), 400),
        "wf2": u(ks[6], (120, 84), 120), "bf2": u(ks[7], (84,), 120),
        "wf3": u(ks[8], (84, 10), 84), "bf3": u(ks[9], (10,), 84),
    }


# ------------------------------ pure-JAX reference ---------------------------

def reference_forward(x_nchw, p):
    hp = lax.Precision.HIGHEST

    def conv(x, w, b):
        y = lax.conv_general_dilated(
            x, w, (1, 1), "VALID",
            dimension_numbers=("NCHW", "OIHW", "NCHW"), precision=hp)
        return jax.nn.relu(y + b[None, :, None, None])

    def pool(x):
        N, C, H, W = x.shape
        return jnp.max(x.reshape(N, C, H // 2, 2, W // 2, 2), axis=(3, 5))

    x = pool(conv(x_nchw, p["w1"], p["b1"]))
    x = pool(conv(x, p["w2"], p["b2"]))
    x = x.reshape(x.shape[0], -1)
    x = jax.nn.relu(jnp.dot(x, p["wf1"], precision=hp) + p["bf1"])
    x = jax.nn.relu(jnp.dot(x, p["wf2"], precision=hp) + p["bf2"])
    return jnp.dot(x, p["wf3"], precision=hp) + p["bf3"]


if __name__ == "__main__":
    key = jax.random.PRNGKey(0)
    kx, kp = jax.random.split(key)
    x = jax.random.normal(kx, (2, 3, 32, 32), jnp.float32)  # CIFAR-10 NCHW
    params = init_params(kp)

    out = jax.block_until_ready(cnn_cifar10_forward(x, params))
    assert out.shape == (2, 10), out.shape

    ref = jax.block_until_ready(reference_forward(x, params))
    max_err = float(jnp.max(jnp.abs(out - ref)))
    assert jnp.allclose(out, ref, rtol=1e-2, atol=1e-2), max_err

    print("KERNEL_OK")
</pallas_src>

<mosaic_0001>
module attributes {stable_mosaic.version = 11 : i64} {
  func.func @_conv_relu_pool_kernel(%arg0: i32, %arg1: memref<392x128xf32, #tpu.memory_space<vmem>>, %arg2: memref<392x128xf32, #tpu.memory_space<vmem>>, %arg3: memref<392x128xf32, #tpu.memory_space<vmem>>, %arg4: memref<392x128xf32, #tpu.memory_space<vmem>>, %arg5: memref<128x128xf32, #tpu.memory_space<vmem>>, %arg6: memref<1x128xf32, #tpu.memory_space<vmem>>, %arg7: memref<392x128xf32, #tpu.memory_space<vmem>>) attributes {dimension_semantics = [#tpu.dimension_semantics<parallel>], iteration_bounds = array<i64: 1>, scalar_prefetch = 0 : i64, scratch_operands = 0 : i64, tpu.core_type = #tpu.core_type<tc>, window_params = [{transform_indices = @transform_0, window_bounds = array<i64: 392, 128>}, {transform_indices = @transform_1, window_bounds = array<i64: 392, 128>}, {transform_indices = @transform_2, window_bounds = array<i64: 392, 128>}, {transform_indices = @transform_3, window_bounds = array<i64: 392, 128>}, {pipeline_mode = #tpu.pipeline_mode<synchronous>, transform_indices = @transform_4, window_bounds = array<i64: 128, 128>}, {pipeline_mode = #tpu.pipeline_mode<synchronous>, transform_indices = @transform_5, window_bounds = array<i64: 1, 128>}, {transform_indices = @transform_6, window_bounds = array<i64: 392, 128>}]} {
    %c0 = arith.constant 0 : index
    %c0_0 = arith.constant 0 : index
    %0 = vector.load %arg5[%c0, %c0_0] : memref<128x128xf32, #tpu.memory_space<vmem>>, vector<128x128xf32>
    %c0_1 = arith.constant 0 : index
    %c0_2 = arith.constant 0 : index
    %1 = vector.load %arg6[%c0_1, %c0_2] : memref<1x128xf32, #tpu.memory_space<vmem>>, vector<1x128xf32>
    %c0_3 = arith.constant 0 : index
    %c0_4 = arith.constant 0 : index
    %2 = vector.load %arg1[%c0_3, %c0_4] : memref<392x128xf32, #tpu.memory_space<vmem>>, vector<392x128xf32>
    %cst = arith.constant dense<0.000000e+00> : vector<392x128xf32>
    %3 = tpu.matmul %2, %0, %cst {dimension_numbers = #tpu.dot_dimension_numbers<[1], [0], [0], [1], [0, 0, 1, 1], [], []>} : vector<392x128xf32>, vector<128x128xf32>, vector<392x128xf32> -> vector<392x128xf32>
    %4 = vector.broadcast %1 : vector<1x128xf32> to vector<392x128xf32>
    %5 = arith.addf %3, %4 : vector<392x128xf32>
    %cst_5 = arith.constant 0.000000e+00 : f32
    %6 = vector.broadcast %cst_5 : f32 to vector<392x128xf32>
    %7 = arith.maximumf %5, %6 : vector<392x128xf32>
    %c0_6 = arith.constant 0 : index
    %c0_7 = arith.constant 0 : index
    %8 = vector.load %arg2[%c0_6, %c0_7] : memref<392x128xf32, #tpu.memory_space<vmem>>, vector<392x128xf32>
    %cst_8 = arith.constant dense<0.000000e+00> : vector<392x128xf32>
    %9 = tpu.matmul %8, %0, %cst_8 {dimension_numbers = #tpu.dot_dimension_numbers<[1], [0], [0], [1], [0, 0, 1, 1], [], []>} : vector<392x128xf32>, vector<128x128xf32>, vector<392x128xf32> -> vector<392x128xf32>
    %10 = vector.broadcast %1 : vector<1x128xf32> to vector<392x128xf32>
    %11 = arith.addf %9, %10 : vector<392x128xf32>
    %cst_9 = arith.constant 0.000000e+00 : f32
    %12 = vector.broadcast %cst_9 : f32 to vector<392x128xf32>
    %13 = arith.maximumf %11, %12 : vector<392x128xf32>
    %14 = arith.maximumf %7, %13 : vector<392x128xf32>
    %c0_10 = arith.constant 0 : index
    %c0_11 = arith.constant 0 : index
    %15 = vector.load %arg3[%c0_10, %c0_11] : memref<392x128xf32, #tpu.memory_space<vmem>>, vector<392x128xf32>
    %cst_12 = arith.constant dense<0.000000e+00> : vector<392x128xf32>
    %16 = tpu.matmul %15, %0, %cst_12 {dimension_numbers = #tpu.dot_dimension_numbers<[1], [0], [0], [1], [0, 0, 1, 1], [], []>} : vector<392x128xf32>, vector<128x128xf32>, vector<392x128xf32> -> vector<392x128xf32>
    %17 = vector.broadcast %1 : vector<1x128xf32> to vector<392x128xf32>
    %18 = arith.addf %16, %17 : vector<392x128xf32>
    %cst_13 = arith.constant 0.000000e+00 : f32
    %19 = vector.broadcast %cst_13 : f32 to vector<392x128xf32>
    %20 = arith.maximumf %18, %19 : vector<392x128xf32>
    %c0_14 = arith.constant 0 : index
    %c0_15 = arith.constant 0 : index
    %21 = vector.load %arg4[%c0_14, %c0_15] : memref<392x128xf32, #tpu.memory_space<vmem>>, vector<392x128xf32>
    %cst_16 = arith.constant dense<0.000000e+00> : vector<392x128xf32>
    %22 = tpu.matmul %21, %0, %cst_16 {dimension_numbers = #tpu.dot_dimension_numbers<[1], [0], [0], [1], [0, 0, 1, 1], [], []>} : vector<392x128xf32>, vector<128x128xf32>, vector<392x128xf32> -> vector<392x128xf32>
    %23 = vector.broadcast %1 : vector<1x128xf32> to vector<392x128xf32>
    %24 = arith.addf %22, %23 : vector<392x128xf32>
    %cst_17 = arith.constant 0.000000e+00 : f32
    %25 = vector.broadcast %cst_17 : f32 to vector<392x128xf32>
    %26 = arith.maximumf %24, %25 : vector<392x128xf32>
    %27 = arith.maximumf %20, %26 : vector<392x128xf32>
    %28 = arith.maximumf %14, %27 : vector<392x128xf32>
    %c0_18 = arith.constant 0 : index
    %c0_19 = arith.constant 0 : index
    %29 = vector.load %arg7[%c0_18, %c0_19] : memref<392x128xf32, #tpu.memory_space<vmem>>, vector<392x128xf32>
    tpu.vector_store %arg7[%c0_18, %c0_19], %28 {strides = array<i32>} : memref<392x128xf32, #tpu.memory_space<vmem>>, vector<392x128xf32>,
    return
  }
  func.func @transform_0(%arg0: i32) -> (i32, i32) {
    %c0_i32 = arith.constant 0 : i32
    %c0_i32_0 = arith.constant 0 : i32
    return %arg0, %c0_i32 : i32, i32
  }
  func.func @transform_1(%arg0: i32) -> (i32, i32) {
    %c0_i32 = arith.constant 0 : i32
    %c0_i32_0 = arith.constant 0 : i32
    return %arg0, %c0_i32 : i32, i32
  }
  func.func @transform_2(%arg0: i32) -> (i32, i32) {
    %c0_i32 = arith.constant 0 : i32
    %c0_i32_0 = arith.constant 0 : i32
    return %arg0, %c0_i32 : i32, i32
  }
  func.func @transform_3(%arg0: i32) -> (i32, i32) {
    %c0_i32 = arith.constant 0 : i32
    %c0_i32_0 = arith.constant 0 : i32
    return %arg0, %c0_i32 : i32, i32
  }
  func.func @transform_4(%arg0: i32) -> (i32, i32) {
    %c0_i32 = arith.constant 0 : i32
    %c0_i32_0 = arith.constant 0 : i32
    %c0_i32_1 = arith.constant 0 : i32
    return %c0_i32, %c0_i32_0 : i32, i32
  }
  func.func @transform_5(%arg0: i32) -> (i32, i32) {
    %c0_i32 = arith.constant 0 : i32
    %c0_i32_0 = arith.constant 0 : i32
    %c0_i32_1 = arith.constant 0 : i32
    return %c0_i32, %c0_i32_0 : i32, i32
  }
  func.func @transform_6(%arg0: i32) -> (i32, i32) {
    %c0_i32 = arith.constant 0 : i32
    %c0_i32_0 = arith.constant 0 : i32
    return %arg0, %c0_i32 : i32, i32
  }
}

</mosaic_0001>

<llo_original>
// kernel: tpu_custom_call.1
$region0: #{tpu_custom_call.1}
  #allocation0 [shape = 'u32[]', space=smem, size = 0x4, offset = 0x4, fixed_abs, tag = 'smem constant byte address 0x4 - core index']
  #allocation1 [shape = 'u32[144,128]{1,0:T(1,128)}', space=vmem, size = 0x12000, scoped, tag = 'internal scratch']
  %s0 = inlined_call_operand.hbm [shape: f32[392,128], index: 0, kind: input, shape index: {}]
  %s1 = inlined_call_operand.hbm [shape: f32[392,128], index: 1, kind: input, shape index: {}]
  %s2 = inlined_call_operand.hbm [shape: f32[392,128], index: 2, kind: input, shape index: {}]
  %s3 = inlined_call_operand.hbm [shape: f32[392,128], index: 3, kind: input, shape index: {}]
  %s4 = inlined_call_operand.hbm [shape: f32[128,128], index: 4, kind: input, shape index: {}]
  %s5 = inlined_call_operand.vmem [shape: f32[1,128], index: 5, kind: input, shape index: {}]
  %s6 = inlined_call_operand.hbm [shape: f32[392,128], index: 6, kind: output, shape index: {}]
  %s7 = sld [smem:[#allocation0]]
  $region54: #{tpu_custom_call.1} parent=0
    _
  %s9 = ssub.s32 1, %s7
  %s10 = scalar_select 0, %s9, %s7
  $region1: #{tpu_custom_call.1} parent=0
    #allocation2 [shape = 'u8[200704]{0}', space=vmem, size = 0x31000, scoped, tag = 'input window, operand 0, single buffered']
    #allocation3 [shape = 's32[1]{0}', space=sflag, size = 0x4, scoped, tag = 'scoped memory for tpu_custom_call.1']
    #allocation4 [shape = 's32[1]{0}', space=sflag, size = 0x4, scoped, tag = 'scoped memory for tpu_custom_call.1']
    #allocation5 [shape = 'u8[200704]{0}', space=vmem, size = 0x31000, scoped, tag = 'input window, operand 1, single buffered']
    #allocation6 [shape = 's32[1]{0}', space=sflag, size = 0x4, scoped, tag = 'scoped memory for tpu_custom_call.1']
    #allocation7 [shape = 'u8[200704]{0}', space=vmem, size = 0x31000, scoped, tag = 'input window, operand 2, single buffered']
    #allocation8 [shape = 'u8[200704]{0}', space=vmem, size = 0x31000, scoped, tag = 'input window, operand 3, single buffered']
    #allocation9 [shape = 's32[1]{0}', space=sflag, size = 0x4, scoped, tag = 'scoped memory for tpu_custom_call.1']
    #allocation10 [shape = 'u8[65536]{0}', space=vmem, size = 0x10000, scoped, tag = 'input window, operand 4, single buffered']
    #allocation11 [shape = 'u8[200704]{0}', space=vmem, size = 0x31000, scoped, tag = 'output window, operand 0, single buffered']
    %11 = vsyncpa [#allocation3], 0
    %12 = vsyncpa [#allocation6], 0
    %13 = vsyncpa [#allocation9], 0
    %14 = vsyncpa [#allocation4], 0
    // Predicated region
    $region2: #{tpu_custom_call.1} parent=1 // pred_check
      _
    $region3: #{tpu_custom_call.1} parent=1 // pred_check_branch
      %16 = sbr.rel (0) target = $region5
    $region4: #{tpu_custom_call.1} parent=1 // pred_region
      %s18 = ssub.s32 6272, 6272
      %19 = vsyncadd [#allocation3], %s18
      %s20 = sshll.u32 [#allocation2], 4
      %s21 = int_to_ptr.vmem [resolvable:$true] %s20
      %26 = dma.hbm_to_vmem [thread:$0]  %s0, 6272, %s21, [#allocation3], 128, 128, 8
    $region5: #{tpu_custom_call.1} parent=1 // pred_fallthru
      _
    // Predicated region
    $region6: #{tpu_custom_call.1} parent=1 // pred_check
      _
    $region7: #{tpu_custom_call.1} parent=1 // pred_check_branch
      %28 = sbr.rel (0) target = $region9
    $region8: #{tpu_custom_call.1} parent=1 // pred_region
      %s30 = ssub.s32 6272, 6272
      %31 = vsyncadd [#allocation6], %s30
      %s32 = sshll.u32 [#allocation5], 4
      %s33 = int_to_ptr.vmem [resolvable:$true] %s32
      %38 = dma.hbm_to_vmem [thread:$0]  %s1, 6272, %s33, [#allocation6], 128, 128, 8
    $region9: #{tpu_custom_call.1} parent=1 // pred_fallthru
      _
    // Predicated region
    $region10: #{tpu_custom_call.1} parent=1 // pred_check
      _
    $region11: #{tpu_custom_call.1} parent=1 // pred_check_branch
      %40 = sbr.rel (0) target = $region13
    $region12: #{tpu_custom_call.1} parent=1 // pred_region
      %s42 = ssub.s32 6272, 6272
      %43 = vsyncadd [#allocation6], %s42
      %s44 = sshll.u32 [#allocation7], 4
      %s45 = int_to_ptr.vmem [resolvable:$true] %s44
      %50 = dma.hbm_to_vmem [thread:$0]  %s2, 6272, %s45, [#allocation6], 128, 128, 8
    $region13: #{tpu_custom_call.1} parent=1 // pred_fallthru
      _
    // Predicated region
    $region14: #{tpu_custom_call.1} parent=1 // pred_check
      _
    $region15: #{tpu_custom_call.1} parent=1 // pred_check_branch
      %52 = sbr.rel (0) target = $region17
    $region16: #{tpu_custom_call.1} parent=1 // pred_region
      %s54 = ssub.s32 6272, 6272
      %55 = vsyncadd [#allocation9], %s54
      %s56 = sshll.u32 [#allocation8], 4
      %s57 = int_to_ptr.vmem [resolvable:$true] %s56
      %62 = dma.hbm_to_vmem [thread:$0]  %s3, 6272, %s57, [#allocation9], 128, 128, 8
    $region17: #{tpu_custom_call.1} parent=1 // pred_fallthru
      _
    // Predicated region
    $region18: #{tpu_custom_call.1} parent=1 // pred_check
      _
    $region19: #{tpu_custom_call.1} parent=1 // pred_check_branch
      %64 = sbr.rel (0) target = $region21
    $region20: #{tpu_custom_call.1} parent=1 // pred_region
      %s66 = ssub.s32 2048, 2048
      %67 = vsyncadd [#allocation9], %s66
      %s68 = sshll.u32 [#allocation10], 4
      %s69 = int_to_ptr.vmem [resolvable:$true] %s68
      %74 = dma.hbm_to_vmem [thread:$0]  %s4, 2048, %s69, [#allocation9], 128, 128, 8
    $region21: #{tpu_custom_call.1} parent=1 // pred_fallthru
      _
    // Predicated region
    $region22: #{tpu_custom_call.1} parent=1 // pred_check
      _
    $region23: #{tpu_custom_call.1} parent=1 // pred_check_branch
      %76 = sbr.rel (0) target = $region25
    $region24: #{tpu_custom_call.1} parent=1 // pred_region
      _
    $region25: #{tpu_custom_call.1} parent=1 // pred_fallthru
      _
    // Predicated region
    $region26: #{tpu_custom_call.1} parent=1 // pred_check
      _
    $region27: #{tpu_custom_call.1} parent=1 // pred_check_branch
      %78 = sbr.rel (0) target = $region29
    $region28: #{tpu_custom_call.1} parent=1 // pred_region
      %79 = dma.done [#allocation3], 6272
    $region29: #{tpu_custom_call.1} parent=1 // pred_fallthru
      _
    // Predicated region
    $region30: #{tpu_custom_call.1} parent=1 // pred_check
      _
    $region31: #{tpu_custom_call.1} parent=1 // pred_check_branch
      %81 = sbr.rel (0) target = $region33
    $region32: #{tpu_custom_call.1} parent=1 // pred_region
      %82 = dma.done [#allocation6], 6272
    $region33: #{tpu_custom_call.1} parent=1 // pred_fallthru
      _
    // Predicated region
    $region34: #{tpu_custom_call.1} parent=1 // pred_check
      _
    $region35: #{tpu_custom_call.1} parent=1 // pred_check_branch
      %84 = sbr.rel (0) target = $region37
    $region36: #{tpu_custom_call.1} parent=1 // pred_region
      %85 = dma.done [#allocation6], 6272
    $region37: #{tpu_custom_call.1} parent=1 // pred_fallthru
      _
    // Predicated region
    $region38: #{tpu_custom_call.1} parent=1 // pred_check
      _
    $region39: #{tpu_custom_call.1} parent=1 // pred_check_branch
      %87 = sbr.rel (0) target = $region41
    $region40: #{tpu_custom_call.1} parent=1 // pred_region
      %88 = dma.done [#allocation9], 6272
    $region41: #{tpu_custom_call.1} parent=1 // pred_fallthru
      _
    // Predicated region
    $region42: #{tpu_custom_call.1} parent=1 // pred_check
      _
    $region43: #{tpu_custom_call.1} parent=1 // pred_check_branch
      %90 = sbr.rel (0) target = $region45
    $region44: #{tpu_custom_call.1} parent=1 // pred_region
      %91 = dma.done [#allocation9], 2048
    $region45: #{tpu_custom_call.1} parent=1 // pred_fallthru
      _
    %v92 = vld [vmem:[#allocation10] sm:$0xff]
    %v93 = vld [vmem:[#allocation10 + $0x8] sm:$0xff]
    %v94 = vld [vmem:[#allocation10 + $0x10] sm:$0xff]
    %v95 = vld [vmem:[#allocation10 + $0x18] sm:$0xff]
    %v96 = vld [vmem:[#allocation10 + $0x20] sm:$0xff]
    %v97 = vld [vmem:[#allocation10 + $0x28] sm:$0xff]
    %v98 = vld [vmem:[#allocation10 + $0x30] sm:$0xff]
    %v99 = vld [vmem:[#allocation10 + $0x38] sm:$0xff]
    %v100 = vld [vmem:[#allocation10 + $0x40] sm:$0xff]
    %v101 = vld [vmem:[#allocation10 + $0x48] sm:$0xff]
    %v102 = vld [vmem:[#allocation10 + $0x50] sm:$0xff]
    %v103 = vld [vmem:[#allocation10 + $0x58] sm:$0xff]
    %v104 = vld [vmem:[#allocation10 + $0x60] sm:$0xff]
    %v105 = vld [vmem:[#allocation10 + $0x68] sm:$0xff]
    %v106 = vld [vmem:[#allocation10 + $0x70] sm:$0xff]
    %v107 = vld [vmem:[#allocation10 + $0x78] sm:$0xff]
    %v108 = vld [vmem:[%s5] sm:$0x1]
    %v109 = vld [vmem:[#allocation2] sm:$0xff]
    %v110 = vld [vmem:[#allocation2 + $0x8] sm:$0xff]
    %v111 = vld [vmem:[#allocation2 + $0x10] sm:$0xff]
    %v112 = vld [vmem:[#allocation2 + $0x18] sm:$0xff]
    %v113 = vld [vmem:[#allocation2 + $0x20] sm:$0xff]
    %v114 = vld [vmem:[#allocation2 + $0x28] sm:$0xff]
    %v115 = vld [vmem:[#allocation2 + $0x30] sm:$0xff]
    %v116 = vld [vmem:[#allocation2 + $0x38] sm:$0xff]
    %v117 = vld [vmem:[#allocation2 + $0x40] sm:$0xff]
    %v118 = vld [vmem:[#allocation2 + $0x48] sm:$0xff]
    %v119 = vld [vmem:[#allocation2 + $0x50] sm:$0xff]
    %v120 = vld [vmem:[#allocation2 + $0x58] sm:$0xff]
    %v121 = vld [vmem:[#allocation2 + $0x60] sm:$0xff]
    %v122 = vld [vmem:[#allocation2 + $0x68] sm:$0xff]
    %v123 = vld [vmem:[#allocation2 + $0x70] sm:$0xff]
    %v124 = vld [vmem:[#allocation2 + $0x78] sm:$0xff]
    %v125 = vld [vmem:[#allocation2 + $0x80] sm:$0xff]
    %v126 = vld [vmem:[#allocation2 + $0x88] sm:$0xff]
    %v127 = vld [vmem:[#allocation2 + $0x90] sm:$0xff]
    %v128 = vld [vmem:[#allocation2 + $0x98] sm:$0xff]
    %v129 = vld [vmem:[#allocation2 + $0xa0] sm:$0xff]
    %v130 = vld [vmem:[#allocation2 + $0xa8] sm:$0xff]
    %v131 = vld [vmem:[#allocation2 + $0xb0] sm:$0xff]
    %v132 = vld [vmem:[#allocation2 + $0xb8] sm:$0xff]
    %v133 = vld [vmem:[#allocation2 + $0xc0] sm:$0xff]
    %v134 = vld [vmem:[#allocation2 + $0xc8] sm:$0xff]
    %v135 = vld [vmem:[#allocation2 + $0xd0] sm:$0xff]
    %v136 = vld [vmem:[#allocation2 + $0xd8] sm:$0xff]
    %v137 = vld [vmem:[#allocation2 + $0xe0] sm:$0xff]
    %v138 = vld [vmem:[#allocation2 + $0xe8] sm:$0xff]
    %v139 = vld [vmem:[#allocation2 + $0xf0] sm:$0xff]
    %v140 = vld [vmem:[#allocation2 + $0xf8] sm:$0xff]
    %v141 = vld [vmem:[#allocation2 + $0x100] sm:$0xff]
    %v142 = vld [vmem:[#allocation2 + $0x108] sm:$0xff]
    %v143 = vld [vmem:[#allocation2 + $0x110] sm:$0xff]
    %v144 = vld [vmem:[#allocation2 + $0x118] sm:$0xff]
    %v145 = vld [vmem:[#allocation2 + $0x120] sm:$0xff]
    %v146 = vld [vmem:[#allocation2 + $0x128] sm:$0xff]
    %v147 = vld [vmem:[#allocation2 + $0x130] sm:$0xff]
    %v148 = vld [vmem:[#allocation2 + $0x138] sm:$0xff]
    %v149 = vld [vmem:[#allocation2 + $0x140] sm:$0xff]
    %v150 = vld [vmem:[#allocation2 + $0x148] sm:$0xff]
    %v151 = vld [vmem:[#allocation2 + $0x150] sm:$0xff]
    %v152 = vld [vmem:[#allocation2 + $0x158] sm:$0xff]
    %v153 = vld [vmem:[#allocation2 + $0x160] sm:$0xff]
    %v154 = vld [vmem:[#allocation2 + $0x168] sm:$0xff]
    %v155 = vld [vmem:[#allocation2 + $0x170] sm:$0xff]
    %v156 = vld [vmem:[#allocation2 + $0x178] sm:$0xff]
    %v157 = vld [vmem:[#allocation2 + $0x180] sm:$0xff]
    %v159 = vlaneseq
    %v160 = vshrl.u32 %v159, 7
    %v161 = vsub.s32 0, %v160
    %v162 = vrot.slane %v108, %v161
    %164 = vmatprep.subr.mxu0 0.0
    %165 = vmatpush1.msra.mxu0 %v107
    %166 = vmatprep.subr.mxu0 0.0
    %167 = vmatpush1.msra.mxu0 %v106
    %168 = vmatprep.subr.mxu0 0.0
    %169 = vmatpush1.msra.mxu0 %v105
    %170 = vmatprep.subr.mxu0 0.0
    %171 = vmatpush1.msra.mxu0 %v104
    %172 = vmatprep.subr.mxu0 0.0
    %173 = vmatpush1.msra.mxu0 %v103
    %174 = vmatprep.subr.mxu0 0.0
    %175 = vmatpush1.msra.mxu0 %v102
    %176 = vmatprep.subr.mxu0 0.0
    %177 = vmatpush1.msra.mxu0 %v101
    %178 = vmatprep.subr.mxu0 0.0
    %179 = vmatpush1.msra.mxu0 %v100
    %180 = vmatprep.subr.mxu0 0.0
    %181 = vmatpush1.msra.mxu0 %v99
    %182 = vmatprep.subr.mxu0 0.0
    %183 = vmatpush1.msra.mxu0 %v98
    %184 = vmatprep.subr.mxu0 0.0
    %185 = vmatpush1.msra.mxu0 %v97
    %186 = vmatprep.subr.mxu0 0.0
    %187 = vmatpush1.msra.mxu0 %v96
    %188 = vmatprep.subr.mxu0 0.0
    %189 = vmatpush1.msra.mxu0 %v95
    %190 = vmatprep.subr.mxu0 0.0
    %191 = vmatpush1.msra.mxu0 %v94
    %192 = vmatprep.subr.mxu0 0.0
    %193 = vmatpush1.msra.mxu0 %v93
    %194 = vmatprep.subr.mxu0 0.0
    %195 = vmatpush1.msra.mxu0 %v92
    %196 = vmatprep.subr.mxu0 0.0
    %197 = vmatpush2.msra.mxu0 0.0
    %198 = vmatprep.subr.mxu0 0.0
    %199 = vmatpush2.msra.mxu0 0.0
    %200 = vmatprep.subr.mxu0 0.0
    %201 = vmatpush2.msra.mxu0 0.0
    %202 = vmatprep.subr.mxu0 0.0
    %203 = vmatpush2.msra.mxu0 0.0
    %204 = vmatprep.subr.mxu0 0.0
    %205 = vmatpush2.msra.mxu0 0.0
    %206 = vmatprep.subr.mxu0 0.0
    %207 = vmatpush2.msra.mxu0 0.0
    %208 = vmatprep.subr.mxu0 0.0
    %209 = vmatpush2.msra.mxu0 0.0
    %210 = vmatprep.subr.mxu0 0.0
    %211 = vmatpush2.msra.mxu0 0.0
    %212 = vmatprep.subr.mxu0 0.0
    %213 = vmatpush2.msra.mxu0 0.0
    %214 = vmatprep.subr.mxu0 0.0
    %215 = vmatpush2.msra.mxu0 0.0
    %216 = vmatprep.subr.mxu0 0.0
    %217 = vmatpush2.msra.mxu0 0.0
    %218 = vmatprep.subr.mxu0 0.0
    %219 = vmatpush2.msra.mxu0 0.0
    %220 = vmatprep.subr.mxu0 0.0
    %221 = vmatpush2.msra.mxu0 0.0
    %222 = vmatprep.subr.mxu0 0.0
    %223 = vmatpush2.msra.mxu0 0.0
    %224 = vmatprep.subr.mxu0 0.0
    %225 = vmatpush2.msra.mxu0 0.0
    %226 = vmatprep.subr.mxu0 0.0
    %227 = vmatpush2.msra.mxu0 0.0
    %228 = vmatprep.mubr.f32.mxu0 0.0
    %229 = vmatmul.mubr.f32.gmra.mxu0 %v109
    %v230 = vpop.f32.mrf.mxu0
    %v231 = vadd.f32 %v162, %v230
    %v232 = vpop.f32.mrf.mxu0
    %233 = vmatprep.mubr.f32.mxu0 0.0
    %234 = vmatmul.mubr.f32.gmra.mxu0 %v110
    %v235 = vpop.f32.mrf.mxu0
    %v236 = vadd.f32 %v162, %v235
    %v237 = vpop.f32.mrf.mxu0
    %238 = vmatprep.mubr.f32.mxu0 0.0
    %239 = vmatmul.mubr.f32.gmra.mxu0 %v111
    %v240 = vpop.f32.mrf.mxu0
    %v241 = vadd.f32 %v162, %v240
    %v242 = vpop.f32.mrf.mxu0
    %243 = vmatprep.mubr.f32.mxu0 0.0
    %244 = vmatmul.mubr.f32.gmra.mxu0 %v112
    %v245 = vpop.f32.mrf.mxu0
    %v246 = vadd.f32 %v162, %v245
    %v247 = vpop.f32.mrf.mxu0
    %248 = vmatprep.mubr.f32.mxu0 0.0
    %249 = vmatmul.mubr.f32.gmra.mxu0 %v113
    %v250 = vpop.f32.mrf.mxu0
    %v251 = vadd.f32 %v162, %v250
    %v252 = vpop.f32.mrf.mxu0
    %253 = vmatprep.mubr.f32.mxu0 0.0
    %254 = vmatmul.mubr.f32.gmra.mxu0 %v114
    %v255 = vpop.f32.mrf.mxu0
    %v256 = vadd.f32 %v162, %v255
    %v257 = vpop.f32.mrf.mxu0
    %258 = vmatprep.mubr.f32.mxu0 0.0
    %259 = vmatmul.mubr.f32.gmra.mxu0 %v115
    %v260 = vpop.f32.mrf.mxu0
    %v261 = vadd.f32 %v162, %v260
    %v262 = vpop.f32.mrf.mxu0
    %263 = vmatprep.mubr.f32.mxu0 0.0
    %264 = vmatmul.mubr.f32.gmra.mxu0 %v116
    %v265 = vpop.f32.mrf.mxu0
    %v266 = vadd.f32 %v162, %v265
    %v267 = vpop.f32.mrf.mxu0
    %268 = vmatprep.mubr.f32.mxu0 0.0
    %269 = vmatmul.mubr.f32.gmra.mxu0 %v117
    %v270 = vpop.f32.mrf.mxu0
    %v271 = vadd.f32 %v162, %v270
    %v272 = vpop.f32.mrf.mxu0
    %273 = vmatprep.mubr.f32.mxu0 0.0
    %274 = vmatmul.mubr.f32.gmra.mxu0 %v118
    %v275 = vpop.f32.mrf.mxu0
    %v276 = vadd.f32 %v162, %v275
    %v277 = vpop.f32.mrf.mxu0
    %278 = vmatprep.mubr.f32.mxu0 0.0
    %279 = vmatmul.mubr.f32.gmra.mxu0 %v119
    %v280 = vpop.f32.mrf.mxu0
    %v281 = vadd.f32 %v162, %v280
    %v282 = vpop.f32.mrf.mxu0
    %283 = vmatprep.mubr.f32.mxu0 0.0
    %284 = vmatmul.mubr.f32.gmra.mxu0 %v120
    %v285 = vpop.f32.mrf.mxu0
    %v286 = vadd.f32 %v162, %v285
    %v287 = vpop.f32.mrf.mxu0
    %288 = vmatprep.mubr.f32.mxu0 0.0
    %289 = vmatmul.mubr.f32.gmra.mxu0 %v121
    %v290 = vpop.f32.mrf.mxu0
    %v291 = vadd.f32 %v162, %v290
    %v292 = vpop.f32.mrf.mxu0
    %293 = vmatprep.mubr.f32.mxu0 0.0
    %294 = vmatmul.mubr.f32.gmra.mxu0 %v122
    %v295 = vpop.f32.mrf.mxu0
    %v296 = vadd.f32 %v162, %v295
    %v297 = vpop.f32.mrf.mxu0
    %298 = vmatprep.mubr.f32.mxu0 0.0
    %299 = vmatmul.mubr.f32.gmra.mxu0 %v123
    %v300 = vpop.f32.mrf.mxu0
    %v301 = vadd.f32 %v162, %v300
    %v302 = vpop.f32.mrf.mxu0
    %303 = vmatprep.mubr.f32.mxu0 0.0
    %304 = vmatmul.mubr.f32.gmra.mxu0 %v124
    %v305 = vpop.f32.mrf.mxu0
    %v306 = vadd.f32 %v162, %v305
    %v307 = vpop.f32.mrf.mxu0
    %308 = vmatprep.mubr.f32.mxu0 0.0
    %309 = vmatmul.mubr.f32.gmra.mxu0 %v125
    %v310 = vpop.f32.mrf.mxu0
    %v311 = vadd.f32 %v162, %v310
    %v312 = vpop.f32.mrf.mxu0
    %313 = vmatprep.mubr.f32.mxu0 0.0
    %314 = vmatmul.mubr.f32.gmra.mxu0 %v126
    %v315 = vpop.f32.mrf.mxu0
    %v316 = vadd.f32 %v162, %v315
    %v317 = vpop.f32.mrf.mxu0
    %318 = vmatprep.mubr.f32.mxu0 0.0
    %319 = vmatmul.mubr.f32.gmra.mxu0 %v127
    %v320 = vpop.f32.mrf.mxu0
    %v321 = vadd.f32 %v162, %v320
    %v322 = vpop.f32.mrf.mxu0
    %323 = vmatprep.mubr.f32.mxu0 0.0
    %324 = vmatmul.mubr.f32.gmra.mxu0 %v128
    %v325 = vpop.f32.mrf.mxu0
    %v326 = vadd.f32 %v162, %v325
    %v327 = vpop.f32.mrf.mxu0
    %328 = vmatprep.mubr.f32.mxu0 0.0
    %329 = vmatmul.mubr.f32.gmra.mxu0 %v129
    %v330 = vpop.f32.mrf.mxu0
    %v331 = vadd.f32 %v162, %v330
    %v332 = vpop.f32.mrf.mxu0
    %333 = vmatprep.mubr.f32.mxu0 0.0
    %334 = vmatmul.mubr.f32.gmra.mxu0 %v130
    %v335 = vpop.f32.mrf.mxu0
    %v336 = vadd.f32 %v162, %v335
    %v337 = vpop.f32.mrf.mxu0
    %338 = vmatprep.mubr.f32.mxu0 0.0
    %339 = vmatmul.mubr.f32.gmra.mxu0 %v131
    %v340 = vpop.f32.mrf.mxu0
    %v341 = vadd.f32 %v162, %v340
    %v342 = vpop.f32.mrf.mxu0
    %343 = vmatprep.mubr.f32.mxu0 0.0
    %344 = vmatmul.mubr.f32.gmra.mxu0 %v132
    %v345 = vpop.f32.mrf.mxu0
    %v346 = vadd.f32 %v162, %v345
    %v347 = vpop.f32.mrf.mxu0
    %348 = vmatprep.mubr.f32.mxu0 0.0
    %349 = vmatmul.mubr.f32.gmra.mxu0 %v133
    %v350 = vpop.f32.mrf.mxu0
    %v351 = vadd.f32 %v162, %v350
    %v352 = vpop.f32.mrf.mxu0
    %353 = vmatprep.mubr.f32.mxu0 0.0
    %354 = vmatmul.mubr.f32.gmra.mxu0 %v134
    %v355 = vpop.f32.mrf.mxu0
    %v356 = vadd.f32 %v162, %v355
    %v357 = vpop.f32.mrf.mxu0
    %358 = vmatprep.mubr.f32.mxu0 0.0
    %359 = vmatmul.mubr.f32.gmra.mxu0 %v135
    %v360 = vpop.f32.mrf.mxu0
    %v361 = vadd.f32 %v162, %v360
    %v362 = vpop.f32.mrf.mxu0
    %363 = vmatprep.mubr.f32.mxu0 0.0
    %364 = vmatmul.mubr.f32.gmra.mxu0 %v136
    %v365 = vpop.f32.mrf.mxu0
    %v366 = vadd.f32 %v162, %v365
    %v367 = vpop.f32.mrf.mxu0
    %368 = vmatprep.mubr.f32.mxu0 0.0
    %369 = vmatmul.mubr.f32.gmra.mxu0 %v137
    %v370 = vpop.f32.mrf.mxu0
    %v371 = vadd.f32 %v162, %v370
    %v372 = vpop.f32.mrf.mxu0
    %373 = vmatprep.mubr.f32.mxu0 0.0
    %374 = vmatmul.mubr.f32.gmra.mxu0 %v138
    %v375 = vpop.f32.mrf.mxu0
    %v376 = vadd.f32 %v162, %v375
    %v377 = vpop.f32.mrf.mxu0
    %378 = vmatprep.mubr.f32.mxu0 0.0
    %379 = vmatmul.mubr.f32.gmra.mxu0 %v139
    %v380 = vpop.f32.mrf.mxu0
    %v381 = vadd.f32 %v162, %v380
    %v382 = vpop.f32.mrf.mxu0
    %383 = vmatprep.mubr.f32.mxu0 0.0
    %384 = vmatmul.mubr.f32.gmra.mxu0 %v140
    %v385 = vpop.f32.mrf.mxu0
    %v386 = vadd.f32 %v162, %v385
    %v387 = vpop.f32.mrf.mxu0
    %388 = vmatprep.mubr.f32.mxu0 0.0
    %389 = vmatmul.mubr.f32.gmra.mxu0 %v141
    %v390 = vpop.f32.mrf.mxu0
    %v391 = vadd.f32 %v162, %v390
    %v392 = vpop.f32.mrf.mxu0
    %393 = vmatprep.mubr.f32.mxu0 0.0
    %394 = vmatmul.mubr.f32.gmra.mxu0 %v142
    %v395 = vpop.f32.mrf.mxu0
    %v396 = vadd.f32 %v162, %v395
    %v397 = vpop.f32.mrf.mxu0
    %398 = vmatprep.mubr.f32.mxu0 0.0
    %399 = vmatmul.mubr.f32.gmra.mxu0 %v143
    %v400 = vpop.f32.mrf.mxu0
    %v401 = vadd.f32 %v162, %v400
    %v402 = vpop.f32.mrf.mxu0
    %403 = vmatprep.mubr.f32.mxu0 0.0
    %404 = vmatmul.mubr.f32.gmra.mxu0 %v144
    %v405 = vpop.f32.mrf.mxu0
    %v406 = vadd.f32 %v162, %v405
    %v407 = vpop.f32.mrf.mxu0
    %408 = vmatprep.mubr.f32.mxu0 0.0
    %409 = vmatmul.mubr.f32.gmra.mxu0 %v145
    %v410 = vpop.f32.mrf.mxu0
    %v411 = vadd.f32 %v162, %v410
    %v412 = vpop.f32.mrf.mxu0
    %413 = vmatprep.mubr.f32.mxu0 0.0
    %414 = vmatmul.mubr.f32.gmra.mxu0 %v146
    %v415 = vpop.f32.mrf.mxu0
    %v416 = vadd.f32 %v162, %v415
    %v417 = vpop.f32.mrf.mxu0
    %418 = vmatprep.mubr.f32.mxu0 0.0
    %419 = vmatmul.mubr.f32.gmra.mxu0 %v147
    %v420 = vpop.f32.mrf.mxu0
    %v421 = vadd.f32 %v162, %v420
    %v422 = vpop.f32.mrf.mxu0
    %423 = vmatprep.mubr.f32.mxu0 0.0
    %424 = vmatmul.mubr.f32.gmra.mxu0 %v148
    %v425 = vpop.f32.mrf.mxu0
    %v426 = vadd.f32 %v162, %v425
    %v427 = vpop.f32.mrf.mxu0
    %428 = vmatprep.mubr.f32.mxu0 0.0
    %429 = vmatmul.mubr.f32.gmra.mxu0 %v149
    %v430 = vpop.f32.mrf.mxu0
    %v431 = vadd.f32 %v162, %v430
    %v432 = vpop.f32.mrf.mxu0
    %433 = vmatprep.mubr.f32.mxu0 0.0
    %434 = vmatmul.mubr.f32.gmra.mxu0 %v150
    %v435 = vpop.f32.mrf.mxu0
    %v436 = vadd.f32 %v162, %v435
    %v437 = vpop.f32.mrf.mxu0
    %438 = vmatprep.mubr.f32.mxu0 0.0
    %439 = vmatmul.mubr.f32.gmra.mxu0 %v151
    %v440 = vpop.f32.mrf.mxu0
    %v441 = vadd.f32 %v162, %v440
    %v442 = vpop.f32.mrf.mxu0
    %443 = vmatprep.mubr.f32.mxu0 0.0
    %444 = vmatmul.mubr.f32.gmra.mxu0 %v152
    %v445 = vpop.f32.mrf.mxu0
    %v446 = vadd.f32 %v162, %v445
    %v447 = vpop.f32.mrf.mxu0
    %448 = vmatprep.mubr.f32.mxu0 0.0
    %449 = vmatmul.mubr.f32.gmra.mxu0 %v153
    %v450 = vpop.f32.mrf.mxu0
    %v451 = vadd.f32 %v162, %v450
    %v452 = vpop.f32.mrf.mxu0
    %453 = vmatprep.mubr.f32.mxu0 0.0
    %454 = vmatmul.mubr.f32.gmra.mxu0 %v154
    %v455 = vpop.f32.mrf.mxu0
    %v456 = vadd.f32 %v162, %v455
    %v457 = vpop.f32.mrf.mxu0
    %458 = vmatprep.mubr.f32.mxu0 0.0
    %459 = vmatmul.mubr.f32.gmra.mxu0 %v155
    %v460 = vpop.f32.mrf.mxu0
    %v461 = vadd.f32 %v162, %v460
    %v462 = vpop.f32.mrf.mxu0
    %463 = vmatprep.mubr.f32.mxu0 0.0
    %464 = vmatmul.mubr.f32.gmra.mxu0 %v156
    %v465 = vpop.f32.mrf.mxu0
    %v466 = vadd.f32 %v162, %v465
    %v467 = vpop.f32.mrf.mxu0
    %468 = vmatprep.mubr.f32.mxu0 0.0
    %469 = vmatmul.mubr.f32.gmra.mxu0 %v157
    %v470 = vpop.f32.mrf.mxu0
    %v471 = vadd.f32 %v162, %v470
    %v472 = vpop.f32.mrf.mxu0
    %473 = vdwg.mxu0
    %v474 = vmax.f32 %v231, 0.0
    %v475 = vmax.f32 %v236, 0.0
    %v476 = vmax.f32 %v241, 0.0
    %v477 = vmax.f32 %v246, 0.0
    %v478 = vmax.f32 %v251, 0.0
    %v479 = vmax.f32 %v256, 0.0
    %v480 = vmax.f32 %v261, 0.0
    %v481 = vmax.f32 %v266, 0.0
    %v482 = vmax.f32 %v271, 0.0
    %v483 = vmax.f32 %v276, 0.0
    %v484 = vmax.f32 %v281, 0.0
    %v485 = vmax.f32 %v286, 0.0
    %v486 = vmax.f32 %v291, 0.0
    %v487 = vmax.f32 %v296, 0.0
    %v488 = vmax.f32 %v301, 0.0
    %v489 = vmax.f32 %v306, 0.0
    %v490 = vmax.f32 %v311, 0.0
    %v491 = vmax.f32 %v316, 0.0
    %v492 = vmax.f32 %v321, 0.0
    %v493 = vmax.f32 %v326, 0.0
    %v494 = vmax.f32 %v331, 0.0
    %v495 = vmax.f32 %v336, 0.0
    %v496 = vmax.f32 %v341, 0.0
    %v497 = vmax.f32 %v346, 0.0
    %v498 = vmax.f32 %v351, 0.0
    %v499 = vmax.f32 %v356, 0.0
    %v500 = vmax.f32 %v361, 0.0
    %v501 = vmax.f32 %v366, 0.0
    %v502 = vmax.f32 %v371, 0.0
    %v503 = vmax.f32 %v376, 0.0
    %v504 = vmax.f32 %v381, 0.0
    %v505 = vmax.f32 %v386, 0.0
    %v506 = vmax.f32 %v391, 0.0
    %v507 = vmax.f32 %v396, 0.0
    %v508 = vmax.f32 %v401, 0.0
    %v509 = vmax.f32 %v406, 0.0
    %v510 = vmax.f32 %v411, 0.0
    %v511 = vmax.f32 %v416, 0.0
    %v512 = vmax.f32 %v421, 0.0
    %v513 = vmax.f32 %v426, 0.0
    %v514 = vmax.f32 %v431, 0.0
    %v515 = vmax.f32 %v436, 0.0
    %v516 = vmax.f32 %v441, 0.0
    %v517 = vmax.f32 %v446, 0.0
    %v518 = vmax.f32 %v451, 0.0
    %v519 = vmax.f32 %v456, 0.0
    %v520 = vmax.f32 %v461, 0.0
    %v521 = vmax.f32 %v466, 0.0
    %v522 = vmax.f32 %v471, 0.0
    %v523 = vld [vmem:[#allocation5] sm:$0xff]
    %v524 = vld [vmem:[#allocation5 + $0x8] sm:$0xff]
    %v525 = vld [vmem:[#allocation5 + $0x10] sm:$0xff]
    %v526 = vld [vmem:[#allocation5 + $0x18] sm:$0xff]
    %v527 = vld [vmem:[#allocation5 + $0x20] sm:$0xff]
    %v528 = vld [vmem:[#allocation5 + $0x28] sm:$0xff]
    %v529 = vld [vmem:[#allocation5 + $0x30] sm:$0xff]
    %v530 = vld [vmem:[#allocation5 + $0x38] sm:$0xff]
    %v531 = vld [vmem:[#allocation5 + $0x40] sm:$0xff]
    %v532 = vld [vmem:[#allocation5 + $0x48] sm:$0xff]
    %v533 = vld [vmem:[#allocation5 + $0x50] sm:$0xff]
    %v534 = vld [vmem:[#allocation5 + $0x58] sm:$0xff]
    %v535 = vld [vmem:[#allocation5 + $0x60] sm:$0xff]
    %v536 = vld [vmem:[#allocation5 + $0x68] sm:$0xff]
    %v537 = vld [vmem:[#allocation5 + $0x70] sm:$0xff]
    %v538 = vld [vmem:[#allocation5 + $0x78] sm:$0xff]
    %v539 = vld [vmem:[#allocation5 + $0x80] sm:$0xff]
    %v540 = vld [vmem:[#allocation5 + $0x88] sm:$0xff]
    %v541 = vld [vmem:[#allocation5 + $0x90] sm:$0xff]
    %v542 = vld [vmem:[#allocation5 + $0x98] sm:$0xff]
    %v543 = vld [vmem:[#allocation5 + $0xa0] sm:$0xff]
    %v544 = vld [vmem:[#allocation5 + $0xa8] sm:$0xff]
    %v545 = vld [vmem:[#allocation5 + $0xb0] sm:$0xff]
    %v546 = vld [vmem:[#allocation5 + $0xb8] sm:$0xff]
    %v547 = vld [vmem:[#allocation5 + $0xc0] sm:$0xff]
    %v548 = vld [vmem:[#allocation5 + $0xc8] sm:$0xff]
    %v549 = vld [vmem:[#allocation5 + $0xd0] sm:$0xff]
    %v550 = vld [vmem:[#allocation5 + $0xd8] sm:$0xff]
    %v551 = vld [vmem:[#allocation5 + $0xe0] sm:$0xff]
    %v552 = vld [vmem:[#allocation5 + $0xe8] sm:$0xff]
    %v553 = vld [vmem:[#allocation5 + $0xf0] sm:$0xff]
    %v554 = vld [vmem:[#allocation5 + $0xf8] sm:$0xff]
    %v555 = vld [vmem:[#allocation5 + $0x100] sm:$0xff]
    %v556 = vld [vmem:[#allocation5 + $0x108] sm:$0xff]
    %v557 = vld [vmem:[#allocation5 + $0x110] sm:$0xff]
    %v558 = vld [vmem:[#allocation5 + $0x118] sm:$0xff]
    %v559 = vld [vmem:[#allocation5 + $0x120] sm:$0xff]
    %v560 = vld [vmem:[#allocation5 + $0x128] sm:$0xff]
    %v561 = vld [vmem:[#allocation5 + $0x130] sm:$0xff]
    %v562 = vld [vmem:[#allocation5 + $0x138] sm:$0xff]
    %v563 = vld [vmem:[#allocation5 + $0x140] sm:$0xff]
    %v564 = vld [vmem:[#allocation5 + $0x148] sm:$0xff]
    %v565 = vld [vmem:[#allocation5 + $0x150] sm:$0xff]
    %v566 = vld [vmem:[#allocation5 + $0x158] sm:$0xff]
    %v567 = vld [vmem:[#allocation5 + $0x160] sm:$0xff]
    %v568 = vld [vmem:[#allocation5 + $0x168] sm:$0xff]
    %v569 = vld [vmem:[#allocation5 + $0x170] sm:$0xff]
    %v570 = vld [vmem:[#allocation5 + $0x178] sm:$0xff]
    %v571 = vld [vmem:[#allocation5 + $0x180] sm:$0xff]
    %572 = vmatprep.subr.mxu0 0.0
    %573 = vmatpush1.msra.mxu0 %v107
    %574 = vmatprep.subr.mxu0 0.0
    %575 = vmatpush1.msra.mxu0 %v106
    %576 = vmatprep.subr.mxu0 0.0
    %577 = vmatpush1.msra.mxu0 %v105
    %578 = vmatprep.subr.mxu0 0.0
    %579 = vmatpush1.msra.mxu0 %v104
    %580 = vmatprep.subr.mxu0 0.0
    %581 = vmatpush1.msra.mxu0 %v103
    %582 = vmatprep.subr.mxu0 0.0
    %583 = vmatpush1.msra.mxu0 %v102
    %584 = vmatprep.subr.mxu0 0.0
    %585 = vmatpush1.msra.mxu0 %v101
    %586 = vmatprep.subr.mxu0 0.0
    %587 = vmatpush1.msra.mxu0 %v100
    %588 = vmatprep.subr.mxu0 0.0
    %589 = vmatpush1.msra.mxu0 %v99
    %590 = vmatprep.subr.mxu0 0.0
    %591 = vmatpush1.msra.mxu0 %v98
    %592 = vmatprep.subr.mxu0 0.0
    %593 = vmatpush1.msra.mxu0 %v97
    %594 = vmatprep.subr.mxu0 0.0
    %595 = vmatpush1.msra.mxu0 %v96
    %596 = vmatprep.subr.mxu0 0.0
    %597 = vmatpush1.msra.mxu0 %v95
    %598 = vmatprep.subr.mxu0 0.0
    %599 = vmatpush1.msra.mxu0 %v94
    %600 = vmatprep.subr.mxu0 0.0
    %601 = vmatpush1.msra.mxu0 %v93
    %602 = vmatprep.subr.mxu0 0.0
    %603 = vmatpush1.msra.mxu0 %v92
    %604 = vmatprep.subr.mxu0 0.0
    %605 = vmatpush2.msra.mxu0 0.0
    %606 = vmatprep.subr.mxu0 0.0
    %607 = vmatpush2.msra.mxu0 0.0
    %608 = vmatprep.subr.mxu0 0.0
    %609 = vmatpush2.msra.mxu0 0.0
    %610 = vmatprep.subr.mxu0 0.0
    %611 = vmatpush2.msra.mxu0 0.0
    %612 = vmatprep.subr.mxu0 0.0
    %613 = vmatpush2.msra.mxu0 0.0
    %614 = vmatprep.subr.mxu0 0.0
    %615 = vmatpush2.msra.mxu0 0.0
    %616 = vmatprep.subr.mxu0 0.0
    %617 = vmatpush2.msra.mxu0 0.0
    %618 = vmatprep.subr.mxu0 0.0
    %619 = vmatpush2.msra.mxu0 0.0
    %620 = vmatprep.subr.mxu0 0.0
    %621 = vmatpush2.msra.mxu0 0.0
    %622 = vmatprep.subr.mxu0 0.0
    %623 = vmatpush2.msra.mxu0 0.0
    %624 = vmatprep.subr.mxu0 0.0
    %625 = vmatpush2.msra.mxu0 0.0
    %626 = vmatprep.subr.mxu0 0.0
    %627 = vmatpush2.msra.mxu0 0.0
    %628 = vmatprep.subr.mxu0 0.0
    %629 = vmatpush2.msra.mxu0 0.0
    %630 = vmatprep.subr.mxu0 0.0
    %631 = vmatpush2.msra.mxu0 0.0
    %632 = vmatprep.subr.mxu0 0.0
    %633 = vmatpush2.msra.mxu0 0.0
    %634 = vmatprep.subr.mxu0 0.0
    %635 = vmatpush2.msra.mxu0 0.0
    %636 = vmatprep.mubr.f32.mxu0 0.0
    %637 = vmatmul.mubr.f32.gmra.mxu0 %v523
    %v638 = vpop.f32.mrf.mxu0
    %v639 = vadd.f32 %v162, %v638
    %v640 = vpop.f32.mrf.mxu0
    %641 = vmatprep.mubr.f32.mxu0 0.0
    %642 = vmatmul.mubr.f32.gmra.mxu0 %v524
    %v643 = vpop.f32.mrf.mxu0
    %v644 = vadd.f32 %v162, %v643
    %v645 = vpop.f32.mrf.mxu0
    %646 = vmatprep.mubr.f32.mxu0 0.0
    %647 = vmatmul.mubr.f32.gmra.mxu0 %v525
    %v648 = vpop.f32.mrf.mxu0
    %v649 = vadd.f32 %v162, %v648
    %v650 = vpop.f32.mrf.mxu0
    %651 = vmatprep.mubr.f32.mxu0 0.0
    %652 = vmatmul.mubr.f32.gmra.mxu0 %v526
    %v653 = vpop.f32.mrf.mxu0
    %v654 = vadd.f32 %v162, %v653
    %v655 = vpop.f32.mrf.mxu0
    %656 = vmatprep.mubr.f32.mxu0 0.0
    %657 = vmatmul.mubr.f32.gmra.mxu0 %v527
    %v658 = vpop.f32.mrf.mxu0
    %v659 = vadd.f32 %v162, %v658
    %v660 = vpop.f32.mrf.mxu0
    %661 = vmatprep.mubr.f32.mxu0 0.0
    %662 = vmatmul.mubr.f32.gmra.mxu0 %v528
    %v663 = vpop.f32.mrf.mxu0
    %v664 = vadd.f32 %v162, %v663
    %v665 = vpop.f32.mrf.mxu0
    %666 = vmatprep.mubr.f32.mxu0 0.0
    %667 = vmatmul.mubr.f32.gmra.mxu0 %v529
    %v668 = vpop.f32.mrf.mxu0
    %v669 = vadd.f32 %v162, %v668
    %v670 = vpop.f32.mrf.mxu0
    %671 = vmatprep.mubr.f32.mxu0 0.0
    %672 = vmatmul.mubr.f32.gmra.mxu0 %v530
    %v673 = vpop.f32.mrf.mxu0
    %v674 = vadd.f32 %v162, %v673
    %v675 = vpop.f32.mrf.mxu0
    %676 = vmatprep.mubr.f32.mxu0 0.0
    %677 = vmatmul.mubr.f32.gmra.mxu0 %v531
    %v678 = vpop.f32.mrf.mxu0
    %v679 = vadd.f32 %v162, %v678
    %v680 = vpop.f32.mrf.mxu0
    %681 = vmatprep.mubr.f32.mxu0 0.0
    %682 = vmatmul.mubr.f32.gmra.mxu0 %v532
    %v683 = vpop.f32.mrf.mxu0
    %v684 = vadd.f32 %v162, %v683
    %v685 = vpop.f32.mrf.mxu0
    %686 = vmatprep.mubr.f32.mxu0 0.0
    %687 = vmatmul.mubr.f32.gmra.mxu0 %v533
    %v688 = vpop.f32.mrf.mxu0
    %v689 = vadd.f32 %v162, %v688
    %v690 = vpop.f32.mrf.mxu0
    %691 = vmatprep.mubr.f32.mxu0 0.0
    %692 = vmatmul.mubr.f32.gmra.mxu0 %v534
    %v693 = vpop.f32.mrf.mxu0
    %v694 = vadd.f32 %v162, %v693
    %v695 = vpop.f32.mrf.mxu0
    %696 = vmatprep.mubr.f32.mxu0 0.0
    %697 = vmatmul.mubr.f32.gmra.mxu0 %v535
    %v698 = vpop.f32.mrf.mxu0
    %v699 = vadd.f32 %v162, %v698
    %v700 = vpop.f32.mrf.mxu0
    %701 = vmatprep.mubr.f32.mxu0 0.0
    %702 = vmatmul.mubr.f32.gmra.mxu0 %v536
    %v703 = vpop.f32.mrf.mxu0
    %v704 = vadd.f32 %v162, %v703
    %v705 = vpop.f32.mrf.mxu0
    %706 = vmatprep.mubr.f32.mxu0 0.0
    %707 = vmatmul.mubr.f32.gmra.mxu0 %v537
    %v708 = vpop.f32.mrf.mxu0
    %v709 = vadd.f32 %v162, %v708
    %v710 = vpop.f32.mrf.mxu0
    %711 = vmatprep.mubr.f32.mxu0 0.0
    %712 = vmatmul.mubr.f32.gmra.mxu0 %v538
    %v713 = vpop.f32.mrf.mxu0
    %v714 = vadd.f32 %v162, %v713
    %v715 = vpop.f32.mrf.mxu0
    %716 = vmatprep.mubr.f32.mxu0 0.0
    %717 = vmatmul.mubr.f32.gmra.mxu0 %v539
    %v718 = vpop.f32.mrf.mxu0
    %v719 = vadd.f32 %v162, %v718
    %v720 = vpop.f32.mrf.mxu0
    %721 = vmatprep.mubr.f32.mxu0 0.0
    %722 = vmatmul.mubr.f32.gmra.mxu0 %v540
    %v723 = vpop.f32.mrf.mxu0
    %v724 = vadd.f32 %v162, %v723
    %v725 = vpop.f32.mrf.mxu0
    %726 = vmatprep.mubr.f32.mxu0 0.0
    %727 = vmatmul.mubr.f32.gmra.mxu0 %v541
    %v728 = vpop.f32.mrf.mxu0
    %v729 = vadd.f32 %v162, %v728
    %v730 = vpop.f32.mrf.mxu0
    %731 = vmatprep.mubr.f32.mxu0 0.0
    %732 = vmatmul.mubr.f32.gmra.mxu0 %v542
    %v733 = vpop.f32.mrf.mxu0
    %v734 = vadd.f32 %v162, %v733
    %v735 = vpop.f32.mrf.mxu0
    %736 = vmatprep.mubr.f32.mxu0 0.0
    %737 = vmatmul.mubr.f32.gmra.mxu0 %v543
    %v738 = vpop.f32.mrf.mxu0
    %v739 = vadd.f32 %v162, %v738
    %v740 = vpop.f32.mrf.mxu0
    %741 = vmatprep.mubr.f32.mxu0 0.0
    %742 = vmatmul.mubr.f32.gmra.mxu0 %v544
    %v743 = vpop.f32.mrf.mxu0
    %v744 = vadd.f32 %v162, %v743
    %v745 = vpop.f32.mrf.mxu0
    %746 = vmatprep.mubr.f32.mxu0 0.0
    %747 = vmatmul.mubr.f32.gmra.mxu0 %v545
    %v748 = vpop.f32.mrf.mxu0
    %v749 = vadd.f32 %v162, %v748
    %v750 = vpop.f32.mrf.mxu0
    %751 = vmatprep.mubr.f32.mxu0 0.0
    %752 = vmatmul.mubr.f32.gmra.mxu0 %v546
    %v753 = vpop.f32.mrf.mxu0
    %v754 = vadd.f32 %v162, %v753
    %v755 = vpop.f32.mrf.mxu0
    %756 = vmatprep.mubr.f32.mxu0 0.0
    %757 = vmatmul.mubr.f32.gmra.mxu0 %v547
    %v758 = vpop.f32.mrf.mxu0
    %v759 = vadd.f32 %v162, %v758
    %v760 = vpop.f32.mrf.mxu0
    %761 = vmatprep.mubr.f32.mxu0 0.0
    %762 = vmatmul.mubr.f32.gmra.mxu0 %v548
    %v763 = vpop.f32.mrf.mxu0
    %v764 = vadd.f32 %v162, %v763
    %v765 = vpop.f32.mrf.mxu0
    %766 = vmatprep.mubr.f32.mxu0 0.0
    %767 = vmatmul.mubr.f32.gmra.mxu0 %v549
    %v768 = vpop.f32.mrf.mxu0
    %v769 = vadd.f32 %v162, %v768
    %v770 = vpop.f32.mrf.mxu0
    %771 = vmatprep.mubr.f32.mxu0 0.0
    %772 = vmatmul.mubr.f32.gmra.mxu0 %v550
    %v773 = vpop.f32.mrf.mxu0
    %v774 = vadd.f32 %v162, %v773
    %v775 = vpop.f32.mrf.mxu0
    %776 = vmatprep.mubr.f32.mxu0 0.0
    %777 = vmatmul.mubr.f32.gmra.mxu0 %v551
    %v778 = vpop.f32.mrf.mxu0
    %v779 = vadd.f32 %v162, %v778
    %v780 = vpop.f32.mrf.mxu0
    %781 = vmatprep.mubr.f32.mxu0 0.0
    %782 = vmatmul.mubr.f32.gmra.mxu0 %v552
    %v783 = vpop.f32.mrf.mxu0
    %v784 = vadd.f32 %v162, %v783
    %v785 = vpop.f32.mrf.mxu0
    %786 = vmatprep.mubr.f32.mxu0 0.0
    %787 = vmatmul.mubr.f32.gmra.mxu0 %v553
    %v788 = vpop.f32.mrf.mxu0
    %v789 = vadd.f32 %v162, %v788
    %v790 = vpop.f32.mrf.mxu0
    %791 = vmatprep.mubr.f32.mxu0 0.0
    %792 = vmatmul.mubr.f32.gmra.mxu0 %v554
    %v793 = vpop.f32.mrf.mxu0
    %v794 = vadd.f32 %v162, %v793
    %v795 = vpop.f32.mrf.mxu0
    %796 = vmatprep.mubr.f32.mxu0 0.0
    %797 = vmatmul.mubr.f32.gmra.mxu0 %v555
    %v798 = vpop.f32.mrf.mxu0
    %v799 = vadd.f32 %v162, %v798
    %v800 = vpop.f32.mrf.mxu0
    %801 = vmatprep.mubr.f32.mxu0 0.0
    %802 = vmatmul.mubr.f32.gmra.mxu0 %v556
    %v803 = vpop.f32.mrf.mxu0
    %v804 = vadd.f32 %v162, %v803
    %v805 = vpop.f32.mrf.mxu0
    %806 = vmatprep.mubr.f32.mxu0 0.0
    %807 = vmatmul.mubr.f32.gmra.mxu0 %v557
    %v808 = vpop.f32.mrf.mxu0
    %v809 = vadd.f32 %v162, %v808
    %v810 = vpop.f32.mrf.mxu0
    %811 = vmatprep.mubr.f32.mxu0 0.0
    %812 = vmatmul.mubr.f32.gmra.mxu0 %v558
    %v813 = vpop.f32.mrf.mxu0
    %v814 = vadd.f32 %v162, %v813
    %v815 = vpop.f32.mrf.mxu0
    %816 = vmatprep.mubr.f32.mxu0 0.0
    %817 = vmatmul.mubr.f32.gmra.mxu0 %v559
    %v818 = vpop.f32.mrf.mxu0
    %v819 = vadd.f32 %v162, %v818
    %v820 = vpop.f32.mrf.mxu0
    %821 = vmatprep.mubr.f32.mxu0 0.0
    %822 = vmatmul.mubr.f32.gmra.mxu0 %v560
    %v823 = vpop.f32.mrf.mxu0
    %v824 = vadd.f32 %v162, %v823
    %v825 = vpop.f32.mrf.mxu0
    %826 = vmatprep.mubr.f32.mxu0 0.0
    %827 = vmatmul.mubr.f32.gmra.mxu0 %v561
    %v828 = vpop.f32.mrf.mxu0
    %v829 = vadd.f32 %v162, %v828
    %v830 = vpop.f32.mrf.mxu0
    %831 = vmatprep.mubr.f32.mxu0 0.0
    %832 = vmatmul.mubr.f32.gmra.mxu0 %v562
    %v833 = vpop.f32.mrf.mxu0
    %v834 = vadd.f32 %v162, %v833
    %v835 = vpop.f32.mrf.mxu0
    %836 = vmatprep.mubr.f32.mxu0 0.0
    %837 = vmatmul.mubr.f32.gmra.mxu0 %v563
    %v838 = vpop.f32.mrf.mxu0
    %v839 = vadd.f32 %v162, %v838
    %v840 = vpop.f32.mrf.mxu0
    %841 = vmatprep.mubr.f32.mxu0 0.0
    %842 = vmatmul.mubr.f32.gmra.mxu0 %v564
    %v843 = vpop.f32.mrf.mxu0
    %v844 = vadd.f32 %v162, %v843
    %v845 = vpop.f32.mrf.mxu0
    %846 = vmatprep.mubr.f32.mxu0 0.0
    %847 = vmatmul.mubr.f32.gmra.mxu0 %v565
    %v848 = vpop.f32.mrf.mxu0
    %v849 = vadd.f32 %v162, %v848
    %v850 = vpop.f32.mrf.mxu0
    %851 = vmatprep.mubr.f32.mxu0 0.0
    %852 = vmatmul.mubr.f32.gmra.mxu0 %v566
    %v853 = vpop.f32.mrf.mxu0
    %v854 = vadd.f32 %v162, %v853
    %v855 = vpop.f32.mrf.mxu0
    %856 = vmatprep.mubr.f32.mxu0 0.0
    %857 = vmatmul.mubr.f32.gmra.mxu0 %v567
    %v858 = vpop.f32.mrf.mxu0
    %v859 = vadd.f32 %v162, %v858
    %v860 = vpop.f32.mrf.mxu0
    %861 = vmatprep.mubr.f32.mxu0 0.0
    %862 = vmatmul.mubr.f32.gmra.mxu0 %v568
    %v863 = vpop.f32.mrf.mxu0
    %v864 = vadd.f32 %v162, %v863
    %v865 = vpop.f32.mrf.mxu0
    %866 = vmatprep.mubr.f32.mxu0 0.0
    %867 = vmatmul.mubr.f32.gmra.mxu0 %v569
    %v868 = vpop.f32.mrf.mxu0
    %v869 = vadd.f32 %v162, %v868
    %v870 = vpop.f32.mrf.mxu0
    %871 = vmatprep.mubr.f32.mxu0 0.0
    %872 = vmatmul.mubr.f32.gmra.mxu0 %v570
    %v873 = vpop.f32.mrf.mxu0
    %v874 = vadd.f32 %v162, %v873
    %v875 = vpop.f32.mrf.mxu0
    %876 = vmatprep.mubr.f32.mxu0 0.0
    %877 = vmatmul.mubr.f32.gmra.mxu0 %v571
    %v878 = vpop.f32.mrf.mxu0
    %v879 = vadd.f32 %v162, %v878
    %v880 = vpop.f32.mrf.mxu0
    %881 = vdwg.mxu0
    %v882 = vmax.f32 %v639, 0.0
    %v883 = vmax.f32 %v644, 0.0
    %v884 = vmax.f32 %v649, 0.0
    %v885 = vmax.f32 %v654, 0.0
    %v886 = vmax.f32 %v659, 0.0
    %v887 = vmax.f32 %v664, 0.0
    %v888 = vmax.f32 %v669, 0.0
    %v889 = vmax.f32 %v674, 0.0
    %v890 = vmax.f32 %v679, 0.0
    %v891 = vmax.f32 %v684, 0.0
    %v892 = vmax.f32 %v689, 0.0
    %v893 = vmax.f32 %v694, 0.0
    %v894 = vmax.f32 %v699, 0.0
    %v895 = vmax.f32 %v704, 0.0
    %v896 = vmax.f32 %v709, 0.0
    %v897 = vmax.f32 %v714, 0.0
    %v898 = vmax.f32 %v719, 0.0
    %v899 = vmax.f32 %v724, 0.0
    %v900 = vmax.f32 %v729, 0.0
    %v901 = vmax.f32 %v734, 0.0
    %v902 = vmax.f32 %v739, 0.0
    %v903 = vmax.f32 %v744, 0.0
    %v904 = vmax.f32 %v749, 0.0
    %v905 = vmax.f32 %v754, 0.0
    %v906 = vmax.f32 %v759, 0.0
    %v907 = vmax.f32 %v764, 0.0
    %v908 = vmax.f32 %v769, 0.0
    %v909 = vmax.f32 %v774, 0.0
    %v910 = vmax.f32 %v779, 0.0
    %v911 = vmax.f32 %v784, 0.0
    %v912 = vmax.f32 %v789, 0.0
    %v913 = vmax.f32 %v794, 0.0
    %v914 = vmax.f32 %v799, 0.0
    %v915 = vmax.f32 %v804, 0.0
    %v916 = vmax.f32 %v809, 0.0
    %v917 = vmax.f32 %v814, 0.0
    %v918 = vmax.f32 %v819, 0.0
    %v919 = vmax.f32 %v824, 0.0
    %v920 = vmax.f32 %v829, 0.0
    %v921 = vmax.f32 %v834, 0.0
    %v922 = vmax.f32 %v839, 0.0
    %v923 = vmax.f32 %v844, 0.0
    %v924 = vmax.f32 %v849, 0.0
    %v925 = vmax.f32 %v854, 0.0
    %v926 = vmax.f32 %v859, 0.0
    %v927 = vmax.f32 %v864, 0.0
    %v928 = vmax.f32 %v869, 0.0
    %v929 = vmax.f32 %v874, 0.0
    %v930 = vmax.f32 %v879, 0.0
    %v931 = vmax.f32 %v474, %v882
    %v932 = vmax.f32 %v475, %v883
    %v933 = vmax.f32 %v476, %v884
    %v934 = vmax.f32 %v477, %v885
    %v935 = vmax.f32 %v478, %v886
    %v936 = vmax.f32 %v479, %v887
    %v937 = vmax.f32 %v480, %v888
    %v938 = vmax.f32 %v481, %v889
    %v939 = vmax.f32 %v482, %v890
    %v940 = vmax.f32 %v483, %v891
    %v941 = vmax.f32 %v484, %v892
    %v942 = vmax.f32 %v485, %v893
    %v943 = vmax.f32 %v486, %v894
    %v944 = vmax.f32 %v487, %v895
    %v945 = vmax.f32 %v488, %v896
    %v946 = vmax.f32 %v489, %v897
    %v947 = vmax.f32 %v490, %v898
    %v948 = vmax.f32 %v491, %v899
    %v949 = vmax.f32 %v492, %v900
    %v950 = vmax.f32 %v493, %v901
    %v951 = vmax.f32 %v494, %v902
    %v952 = vmax.f32 %v495, %v903
    %v953 = vmax.f32 %v496, %v904
    %v954 = vmax.f32 %v497, %v905
    %v955 = vmax.f32 %v498, %v906
    %v956 = vmax.f32 %v499, %v907
    %v957 = vmax.f32 %v500, %v908
    %v958 = vmax.f32 %v501, %v909
    %v959 = vmax.f32 %v502, %v910
    %v960 = vmax.f32 %v503, %v911
    %v961 = vmax.f32 %v504, %v912
    %v962 = vmax.f32 %v505, %v913
    %v963 = vmax.f32 %v506, %v914
    %v964 = vmax.f32 %v507, %v915
    %v965 = vmax.f32 %v508, %v916
    %v966 = vmax.f32 %v509, %v917
    %v967 = vmax.f32 %v510, %v918
    %v968 = vmax.f32 %v511, %v919
    %v969 = vmax.f32 %v512, %v920
    %v970 = vmax.f32 %v513, %v921
    %v971 = vmax.f32 %v514, %v922
    %v972 = vmax.f32 %v515, %v923
    %v973 = vmax.f32 %v516, %v924
    %v974 = vmax.f32 %v517, %v925
    %v975 = vmax.f32 %v518, %v926
    %v976 = vmax.f32 %v519, %v927
    %v977 = vmax.f32 %v520, %v928
    %v978 = vmax.f32 %v521, %v929
    %v979 = vmax.f32 %v522, %v930
    %v980 = vld [vmem:[#allocation7] sm:$0xff]
    %v981 = vld [vmem:[#allocation7 + $0x8] sm:$0xff]
    %v982 = vld [vmem:[#allocation7 + $0x10] sm:$0xff]
    %v983 = vld [vmem:[#allocation7 + $0x18] sm:$0xff]
    %v984 = vld [vmem:[#allocation7 + $0x20] sm:$0xff]
    %v985 = vld [vmem:[#allocation7 + $0x28] sm:$0xff]
    %v986 = vld [vmem:[#allocation7 + $0x30] sm:$0xff]
    %v987 = vld [vmem:[#allocation7 + $0x38] sm:$0xff]
    %v988 = vld [vmem:[#allocation7 + $0x40] sm:$0xff]
    %v989 = vld [vmem:[#allocation7 + $0x48] sm:$0xff]
    %v990 = vld [vmem:[#allocation7 + $0x50] sm:$0xff]
    %v991 = vld [vmem:[#allocation7 + $0x58] sm:$0xff]
    %v992 = vld [vmem:[#allocation7 + $0x60] sm:$0xff]
    %v993 = vld [vmem:[#allocation7 + $0x68] sm:$0xff]
    %v994 = vld [vmem:[#allocation7 + $0x70] sm:$0xff]
    %v995 = vld [vmem:[#allocation7 + $0x78] sm:$0xff]
    %v996 = vld [vmem:[#allocation7 + $0x80] sm:$0xff]
    %v997 = vld [vmem:[#allocation7 + $0x88] sm:$0xff]
    %v998 = vld [vmem:[#allocation7 + $0x90] sm:$0xff]
    %v999 = vld [vmem:[#allocation7 + $0x98] sm:$0xff]
    %v1000 = vld [vmem:[#allocation7 + $0xa0] sm:$0xff]
    %v1001 = vld [vmem:[#allocation7 + $0xa8] sm:$0xff]
    %v1002 = vld [vmem:[#allocation7 + $0xb0] sm:$0xff]
    %v1003 = vld [vmem:[#allocation7 + $0xb8] sm:$0xff]
    %v1004 = vld [vmem:[#allocation7 + $0xc0] sm:$0xff]
    %v1005 = vld [vmem:[#allocation7 + $0xc8] sm:$0xff]
    %v1006 = vld [vmem:[#allocation7 + $0xd0] sm:$0xff]
    %v1007 = vld [vmem:[#allocation7 + $0xd8] sm:$0xff]
    %v1008 = vld [vmem:[#allocation7 + $0xe0] sm:$0xff]
    %v1009 = vld [vmem:[#allocation7 + $0xe8] sm:$0xff]
    %v1010 = vld [vmem:[#allocation7 + $0xf0] sm:$0xff]
    %v1011 = vld [vmem:[#allocation7 + $0xf8] sm:$0xff]
    %v1012 = vld [vmem:[#allocation7 + $0x100] sm:$0xff]
    %v1013 = vld [vmem:[#allocation7 + $0x108] sm:$0xff]
    %v1014 = vld [vmem:[#allocation7 + $0x110] sm:$0xff]
    %v1015 = vld [vmem:[#allocation7 + $0x118] sm:$0xff]
    %v1016 = vld [vmem:[#allocation7 + $0x120] sm:$0xff]
    %v1017 = vld [vmem:[#allocation7 + $0x128] sm:$0xff]
    %v1018 = vld [vmem:[#allocation7 + $0x130] sm:$0xff]
    %v1019 = vld [vmem:[#allocation7 + $0x138] sm:$0xff]
    %v1020 = vld [vmem:[#allocation7 + $0x140] sm:$0xff]
    %v1021 = vld [vmem:[#allocation7 + $0x148] sm:$0xff]
    %v1022 = vld [vmem:[#allocation7 + $0x150] sm:$0xff]
    %v1023 = vld [vmem:[#allocation7 + $0x158] sm:$0xff]
    %v1024 = vld [vmem:[#allocation7 + $0x160] sm:$0xff]
    %v1025 = vld [vmem:[#allocation7 + $0x168] sm:$0xff]
    %v1026 = vld [vmem:[#allocation7 + $0x170] sm:$0xff]
    %v1027 = vld [vmem:[#allocation7 + $0x178] sm:$0xff]
    %v1028 = vld [vmem:[#allocation7 + $0x180] sm:$0xff]
    %1029 = vmatprep.subr.mxu0 0.0
    %1030 = vmatpush1.msra.mxu0 %v107
    %1031 = vmatprep.subr.mxu0 0.0
    %1032 = vmatpush1.msra.mxu0 %v106
    %1033 = vmatprep.subr.mxu0 0.0
    %1034 = vmatpush1.msra.mxu0 %v105
    %1035 = vmatprep.subr.mxu0 0.0
    %1036 = vmatpush1.msra.mxu0 %v104
    %1037 = vmatprep.subr.mxu0 0.0
    %1038 = vmatpush1.msra.mxu0 %v103
    %1039 = vmatprep.subr.mxu0 0.0
    %1040 = vmatpush1.msra.mxu0 %v102
    %1041 = vmatprep.subr.mxu0 0.0
    %1042 = vmatpush1.msra.mxu0 %v101
    %1043 = vmatprep.subr.mxu0 0.0
    %1044 = vmatpush1.msra.mxu0 %v100
    %1045 = vmatprep.subr.mxu0 0.0
    %1046 = vmatpush1.msra.mxu0 %v99
    %1047 = vmatprep.subr.mxu0 0.0
    %1048 = vmatpush1.msra.mxu0 %v98
    %1049 = vmatprep.subr.mxu0 0.0
    %1050 = vmatpush1.msra.mxu0 %v97
    %1051 = vmatprep.subr.mxu0 0.0
    %1052 = vmatpush1.msra.mxu0 %v96
    %1053 = vmatprep.subr.mxu0 0.0
    %1054 = vmatpush1.msra.mxu0 %v95
    %1055 = vmatprep.subr.mxu0 0.0
    %1056 = vmatpush1.msra.mxu0 %v94
    %1057 = vmatprep.subr.mxu0 0.0
    %1058 = vmatpush1.msra.mxu0 %v93
    %1059 = vmatprep.subr.mxu0 0.0
    %1060 = vmatpush1.msra.mxu0 %v92
    %1061 = vmatprep.subr.mxu0 0.0
    %1062 = vmatpush2.msra.mxu0 0.0
    %1063 = vmatprep.subr.mxu0 0.0
    %1064 = vmatpush2.msra.mxu0 0.0
    %1065 = vmatprep.subr.mxu0 0.0
    %1066 = vmatpush2.msra.mxu0 0.0
    %1067 = vmatprep.subr.mxu0 0.0
    %1068 = vmatpush2.msra.mxu0 0.0
    %1069 = vmatprep.subr.mxu0 0.0
    %1070 = vmatpush2.msra.mxu0 0.0
    %1071 = vmatprep.subr.mxu0 0.0
    %1072 = vmatpush2.msra.mxu0 0.0
    %1073 = vmatprep.subr.mxu0 0.0
    %1074 = vmatpush2.msra.mxu0 0.0
    %1075 = vmatprep.subr.mxu0 0.0
    %1076 = vmatpush2.msra.mxu0 0.0
    %1077 = vmatprep.subr.mxu0 0.0
    %1078 = vmatpush2.msra.mxu0 0.0
    %1079 = vmatprep.subr.mxu0 0.0
    %1080 = vmatpush2.msra.mxu0 0.0
    %1081 = vmatprep.subr.mxu0 0.0
    %1082 = vmatpush2.msra.mxu0 0.0
    %1083 = vmatprep.subr.mxu0 0.0
    %1084 = vmatpush2.msra.mxu0 0.0
    %1085 = vmatprep.subr.mxu0 0.0
    %1086 = vmatpush2.msra.mxu0 0.0
    %1087 = vmatprep.subr.mxu0 0.0
    %1088 = vmatpush2.msra.mxu0 0.0
    %1089 = vmatprep.subr.mxu0 0.0
    %1090 = vmatpush2.msra.mxu0 0.0
    %1091 = vmatprep.subr.mxu0 0.0
    %1092 = vmatpush2.msra.mxu0 0.0
    %1093 = vmatprep.mubr.f32.mxu0 0.0
    %1094 = vmatmul.mubr.f32.gmra.mxu0 %v980
    %v1095 = vpop.f32.mrf.mxu0
    %v1096 = vadd.f32 %v162, %v1095
    %v1097 = vpop.f32.mrf.mxu0
    %1098 = vmatprep.mubr.f32.mxu0 0.0
    %1099 = vmatmul.mubr.f32.gmra.mxu0 %v981
    %v1100 = vpop.f32.mrf.mxu0
    %v1101 = vadd.f32 %v162, %v1100
    %v1102 = vpop.f32.mrf.mxu0
    %1103 = vmatprep.mubr.f32.mxu0 0.0
    %1104 = vmatmul.mubr.f32.gmra.mxu0 %v982
    %v1105 = vpop.f32.mrf.mxu0
    %v1106 = vadd.f32 %v162, %v1105
    %v1107 = vpop.f32.mrf.mxu0
    %1108 = vmatprep.mubr.f32.mxu0 0.0
    %1109 = vmatmul.mubr.f32.gmra.mxu0 %v983
    %v1110 = vpop.f32.mrf.mxu0
    %v1111 = vadd.f32 %v162, %v1110
    %v1112 = vpop.f32.mrf.mxu0
    %1113 = vmatprep.mubr.f32.mxu0 0.0
    %1114 = vmatmul.mubr.f32.gmra.mxu0 %v984
    %v1115 = vpop.f32.mrf.mxu0
    %v1116 = vadd.f32 %v162, %v1115
    %v1117 = vpop.f32.mrf.mxu0
    %1118 = vmatprep.mubr.f32.mxu0 0.0
    %1119 = vmatmul.mubr.f32.gmra.mxu0 %v985
    %v1120 = vpop.f32.mrf.mxu0
    %v1121 = vadd.f32 %v162, %v1120
    %v1122 = vpop.f32.mrf.mxu0
    %1123 = vmatprep.mubr.f32.mxu0 0.0
    %1124 = vmatmul.mubr.f32.gmra.mxu0 %v986
    %v1125 = vpop.f32.mrf.mxu0
    %v1126 = vadd.f32 %v162, %v1125
    %v1127 = vpop.f32.mrf.mxu0
    %1128 = vmatprep.mubr.f32.mxu0 0.0
    %1129 = vmatmul.mubr.f32.gmra.mxu0 %v987
    %v1130 = vpop.f32.mrf.mxu0
    %v1131 = vadd.f32 %v162, %v1130
    %v1132 = vpop.f32.mrf.mxu0
    %1133 = vmatprep.mubr.f32.mxu0 0.0
    %1134 = vmatmul.mubr.f32.gmra.mxu0 %v988
    %v1135 = vpop.f32.mrf.mxu0
    %v1136 = vadd.f32 %v162, %v1135
    %v1137 = vpop.f32.mrf.mxu0
    %1138 = vmatprep.mubr.f32.mxu0 0.0
    %1139 = vmatmul.mubr.f32.gmra.mxu0 %v989
    %v1140 = vpop.f32.mrf.mxu0
    %v1141 = vadd.f32 %v162, %v1140
    %v1142 = vpop.f32.mrf.mxu0
    %1143 = vmatprep.mubr.f32.mxu0 0.0
    %1144 = vmatmul.mubr.f32.gmra.mxu0 %v990
    %v1145 = vpop.f32.mrf.mxu0
    %v1146 = vadd.f32 %v162, %v1145
    %v1147 = vpop.f32.mrf.mxu0
    %1148 = vmatprep.mubr.f32.mxu0 0.0
    %1149 = vmatmul.mubr.f32.gmra.mxu0 %v991
    %v1150 = vpop.f32.mrf.mxu0
    %v1151 = vadd.f32 %v162, %v1150
    %v1152 = vpop.f32.mrf.mxu0
    %1153 = vmatprep.mubr.f32.mxu0 0.0
    %1154 = vmatmul.mubr.f32.gmra.mxu0 %v992
    %v1155 = vpop.f32.mrf.mxu0
    %v1156 = vadd.f32 %v162, %v1155
    %v1157 = vpop.f32.mrf.mxu0
    %1158 = vmatprep.mubr.f32.mxu0 0.0
    %1159 = vmatmul.mubr.f32.gmra.mxu0 %v993
    %v1160 = vpop.f32.mrf.mxu0
    %v1161 = vadd.f32 %v162, %v1160
    %v1162 = vpop.f32.mrf.mxu0
    %1163 = vmatprep.mubr.f32.mxu0 0.0
    %1164 = vmatmul.mubr.f32.gmra.mxu0 %v994
    %v1165 = vpop.f32.mrf.mxu0
    %v1166 = vadd.f32 %v162, %v1165
    %v1167 = vpop.f32.mrf.mxu0
    %1168 = vmatprep.mubr.f32.mxu0 0.0
    %1169 = vmatmul.mubr.f32.gmra.mxu0 %v995
    %v1170 = vpop.f32.mrf.mxu0
    %v1171 = vadd.f32 %v162, %v1170
    %v1172 = vpop.f32.mrf.mxu0
    %1173 = vmatprep.mubr.f32.mxu0 0.0
    %1174 = vmatmul.mubr.f32.gmra.mxu0 %v996
    %v1175 = vpop.f32.mrf.mxu0
    %v1176 = vadd.f32 %v162, %v1175
    %v1177 = vpop.f32.mrf.mxu0
    %1178 = vmatprep.mubr.f32.mxu0 0.0
    %1179 = vmatmul.mubr.f32.gmra.mxu0 %v997
    %v1180 = vpop.f32.mrf.mxu0
    %v1181 = vadd.f32 %v162, %v1180
    %v1182 = vpop.f32.mrf.mxu0
    %1183 = vmatprep.mubr.f32.mxu0 0.0
    %1184 = vmatmul.mubr.f32.gmra.mxu0 %v998
    %v1185 = vpop.f32.mrf.mxu0
    %v1186 = vadd.f32 %v162, %v1185
    %v1187 = vpop.f32.mrf.mxu0
    %1188 = vmatprep.mubr.f32.mxu0 0.0
    %1189 = vmatmul.mubr.f32.gmra.mxu0 %v999
    %v1190 = vpop.f32.mrf.mxu0
    %v1191 = vadd.f32 %v162, %v1190
    %v1192 = vpop.f32.mrf.mxu0
    %1193 = vmatprep.mubr.f32.mxu0 0.0
    %1194 = vmatmul.mubr.f32.gmra.mxu0 %v1000
    %v1195 = vpop.f32.mrf.mxu0
    %v1196 = vadd.f32 %v162, %v1195
    %v1197 = vpop.f32.mrf.mxu0
    %1198 = vmatprep.mubr.f32.mxu0 0.0
    %1199 = vmatmul.mubr.f32.gmra.mxu0 %v1001
    %v1200 = vpop.f32.mrf.mxu0
    %v1201 = vadd.f32 %v162, %v1200
    %v1202 = vpop.f32.mrf.mxu0
    %1203 = vmatprep.mubr.f32.mxu0 0.0
    %1204 = vmatmul.mubr.f32.gmra.mxu0 %v1002
    %v1205 = vpop.f32.mrf.mxu0
    %v1206 = vadd.f32 %v162, %v1205
    %v1207 = vpop.f32.mrf.mxu0
    %1208 = vmatprep.mubr.f32.mxu0 0.0
    %1209 = vmatmul.mubr.f32.gmra.mxu0 %v1003
    %v1210 = vpop.f32.mrf.mxu0
    %v1211 = vadd.f32 %v162, %v1210
    %v1212 = vpop.f32.mrf.mxu0
    %1213 = vmatprep.mubr.f32.mxu0 0.0
    %1214 = vmatmul.mubr.f32.gmra.mxu0 %v1004
    %v1215 = vpop.f32.mrf.mxu0
    %v1216 = vadd.f32 %v162, %v1215
    %v1217 = vpop.f32.mrf.mxu0
    %1218 = vmatprep.mubr.f32.mxu0 0.0
    %1219 = vmatmul.mubr.f32.gmra.mxu0 %v1005
    %v1220 = vpop.f32.mrf.mxu0
    %v1221 = vadd.f32 %v162, %v1220
    %v1222 = vpop.f32.mrf.mxu0
    %1223 = vmatprep.mubr.f32.mxu0 0.0
    %1224 = vmatmul.mubr.f32.gmra.mxu0 %v1006
    %v1225 = vpop.f32.mrf.mxu0
    %v1226 = vadd.f32 %v162, %v1225
    %v1227 = vpop.f32.mrf.mxu0
    %1228 = vmatprep.mubr.f32.mxu0 0.0
    %1229 = vmatmul.mubr.f32.gmra.mxu0 %v1007
    %v1230 = vpop.f32.mrf.mxu0
    %v1231 = vadd.f32 %v162, %v1230
    %v1232 = vpop.f32.mrf.mxu0
    %1233 = vmatprep.mubr.f32.mxu0 0.0
    %1234 = vmatmul.mubr.f32.gmra.mxu0 %v1008
    %v1235 = vpop.f32.mrf.mxu0
    %v1236 = vadd.f32 %v162, %v1235
    %v1237 = vpop.f32.mrf.mxu0
    %1238 = vmatprep.mubr.f32.mxu0 0.0
    %1239 = vmatmul.mubr.f32.gmra.mxu0 %v1009
    %v1240 = vpop.f32.mrf.mxu0
    %v1241 = vadd.f32 %v162, %v1240
    %v1242 = vpop.f32.mrf.mxu0
    %1243 = vmatprep.mubr.f32.mxu0 0.0
    %1244 = vmatmul.mubr.f32.gmra.mxu0 %v1010
    %v1245 = vpop.f32.mrf.mxu0
    %v1246 = vadd.f32 %v162, %v1245
    %v1247 = vpop.f32.mrf.mxu0
    %1248 = vmatprep.mubr.f32.mxu0 0.0
    %1249 = vmatmul.mubr.f32.gmra.mxu0 %v1011
    %v1250 = vpop.f32.mrf.mxu0
    %v1251 = vadd.f32 %v162, %v1250
    %v1252 = vpop.f32.mrf.mxu0
    %1253 = vmatprep.mubr.f32.mxu0 0.0
    %1254 = vmatmul.mubr.f32.gmra.mxu0 %v1012
    %v1255 = vpop.f32.mrf.mxu0
    %v1256 = vadd.f32 %v162, %v1255
    %v1257 = vpop.f32.mrf.mxu0
    %1258 = vmatprep.mubr.f32.mxu0 0.0
    %1259 = vmatmul.mubr.f32.gmra.mxu0 %v1013
    %v1260 = vpop.f32.mrf.mxu0
    %v1261 = vadd.f32 %v162, %v1260
    %v1262 = vpop.f32.mrf.mxu0
    %1263 = vmatprep.mubr.f32.mxu0 0.0
    %1264 = vmatmul.mubr.f32.gmra.mxu0 %v1014
    %v1265 = vpop.f32.mrf.mxu0
    %v1266 = vadd.f32 %v162, %v1265
    %v1267 = vpop.f32.mrf.mxu0
    %1268 = vmatprep.mubr.f32.mxu0 0.0
    %1269 = vmatmul.mubr.f32.gmra.mxu0 %v1015
    %v1270 = vpop.f32.mrf.mxu0
    %v1271 = vadd.f32 %v162, %v1270
    %v1272 = vpop.f32.mrf.mxu0
    %1273 = vmatprep.mubr.f32.mxu0 0.0
    %1274 = vmatmul.mubr.f32.gmra.mxu0 %v1016
    %v1275 = vpop.f32.mrf.mxu0
    %v1276 = vadd.f32 %v162, %v1275
    %v1277 = vpop.f32.mrf.mxu0
    %1278 = vmatprep.mubr.f32.mxu0 0.0
    %1279 = vmatmul.mubr.f32.gmra.mxu0 %v1017
    %v1280 = vpop.f32.mrf.mxu0
    %v1281 = vadd.f32 %v162, %v1280
    %v1282 = vpop.f32.mrf.mxu0
    %1283 = vmatprep.mubr.f32.mxu0 0.0
    %1284 = vmatmul.mubr.f32.gmra.mxu0 %v1018
    %v1285 = vpop.f32.mrf.mxu0
    %v1286 = vadd.f32 %v162, %v1285
    %v1287 = vpop.f32.mrf.mxu0
    %1288 = vmatprep.mubr.f32.mxu0 0.0
    %1289 = vmatmul.mubr.f32.gmra.mxu0 %v1019
    %v1290 = vpop.f32.mrf.mxu0
    %v1291 = vadd.f32 %v162, %v1290
    %v1292 = vpop.f32.mrf.mxu0
    %1293 = vmatprep.mubr.f32.mxu0 0.0
    %1294 = vmatmul.mubr.f32.gmra.mxu0 %v1020
    %v1295 = vpop.f32.mrf.mxu0
    %v1296 = vadd.f32 %v162, %v1295
    %v1297 = vpop.f32.mrf.mxu0
    %1298 = vmatprep.mubr.f32.mxu0 0.0
    %1299 = vmatmul.mubr.f32.gmra.mxu0 %v1021
    %v1300 = vpop.f32.mrf.mxu0
    %v1301 = vadd.f32 %v162, %v1300
    %v1302 = vpop.f32.mrf.mxu0
    %1303 = vmatprep.mubr.f32.mxu0 0.0
    %1304 = vmatmul.mubr.f32.gmra.mxu0 %v1022
    %v1305 = vpop.f32.mrf.mxu0
    %v1306 = vadd.f32 %v162, %v1305
    %v1307 = vpop.f32.mrf.mxu0
    %1308 = vmatprep.mubr.f32.mxu0 0.0
    %1309 = vmatmul.mubr.f32.gmra.mxu0 %v1023
    %v1310 = vpop.f32.mrf.mxu0
    %v1311 = vadd.f32 %v162, %v1310
    %v1312 = vpop.f32.mrf.mxu0
    %1313 = vmatprep.mubr.f32.mxu0 0.0
    %1314 = vmatmul.mubr.f32.gmra.mxu0 %v1024
    %v1315 = vpop.f32.mrf.mxu0
    %v1316 = vadd.f32 %v162, %v1315
    %v1317 = vpop.f32.mrf.mxu0
    %1318 = vmatprep.mubr.f32.mxu0 0.0
    %1319 = vmatmul.mubr.f32.gmra.mxu0 %v1025
    %v1320 = vpop.f32.mrf.mxu0
    %v1321 = vadd.f32 %v162, %v1320
    %v1322 = vpop.f32.mrf.mxu0
    %1323 = vmatprep.mubr.f32.mxu0 0.0
    %1324 = vmatmul.mubr.f32.gmra.mxu0 %v1026
    %v1325 = vpop.f32.mrf.mxu0
    %v1326 = vadd.f32 %v162, %v1325
    %v1327 = vpop.f32.mrf.mxu0
    %1328 = vmatprep.mubr.f32.mxu0 0.0
    %1329 = vmatmul.mubr.f32.gmra.mxu0 %v1027
    %v1330 = vpop.f32.mrf.mxu0
    %v1331 = vadd.f32 %v162, %v1330
    %v1332 = vpop.f32.mrf.mxu0
    %1333 = vmatprep.mubr.f32.mxu0 0.0
    %1334 = vmatmul.mubr.f32.gmra.mxu0 %v1028
    %v1335 = vpop.f32.mrf.mxu0
    %v1336 = vadd.f32 %v162, %v1335
    %v1337 = vpop.f32.mrf.mxu0
    %1338 = vdwg.mxu0
    %v1339 = vmax.f32 %v1096, 0.0
    %v1340 = vmax.f32 %v1101, 0.0
    %v1341 = vmax.f32 %v1106, 0.0
    %v1342 = vmax.f32 %v1111, 0.0
    %v1343 = vmax.f32 %v1116, 0.0
    %v1344 = vmax.f32 %v1121, 0.0
    %v1345 = vmax.f32 %v1126, 0.0
    %v1346 = vmax.f32 %v1131, 0.0
    %v1347 = vmax.f32 %v1136, 0.0
    %v1348 = vmax.f32 %v1141, 0.0
    %v1349 = vmax.f32 %v1146, 0.0
    %v1350 = vmax.f32 %v1151, 0.0
    %v1351 = vmax.f32 %v1156, 0.0
    %v1352 = vmax.f32 %v1161, 0.0
    %v1353 = vmax.f32 %v1166, 0.0
    %v1354 = vmax.f32 %v1171, 0.0
    %v1355 = vmax.f32 %v1176, 0.0
    %v1356 = vmax.f32 %v1181, 0.0
    %v1357 = vmax.f32 %v1186, 0.0
    %v1358 = vmax.f32 %v1191, 0.0
    %v1359 = vmax.f32 %v1196, 0.0
    %v1360 = vmax.f32 %v1201, 0.0
    %v1361 = vmax.f32 %v1206, 0.0
    %v1362 = vmax.f32 %v1211, 0.0
    %v1363 = vmax.f32 %v1216, 0.0
    %v1364 = vmax.f32 %v1221, 0.0
    %v1365 = vmax.f32 %v1226, 0.0
    %v1366 = vmax.f32 %v1231, 0.0
    %v1367 = vmax.f32 %v1236, 0.0
    %v1368 = vmax.f32 %v1241, 0.0
    %v1369 = vmax.f32 %v1246, 0.0
    %v1370 = vmax.f32 %v1251, 0.0
    %v1371 = vmax.f32 %v1256, 0.0
    %v1372 = vmax.f32 %v1261, 0.0
    %v1373 = vmax.f32 %v1266, 0.0
    %v1374 = vmax.f32 %v1271, 0.0
    %v1375 = vmax.f32 %v1276, 0.0
    %v1376 = vmax.f32 %v1281, 0.0
    %v1377 = vmax.f32 %v1286, 0.0
    %v1378 = vmax.f32 %v1291, 0.0
    %v1379 = vmax.f32 %v1296, 0.0
    %v1380 = vmax.f32 %v1301, 0.0
    %v1381 = vmax.f32 %v1306, 0.0
    %v1382 = vmax.f32 %v1311, 0.0
    %v1383 = vmax.f32 %v1316, 0.0
    %v1384 = vmax.f32 %v1321, 0.0
    %v1385 = vmax.f32 %v1326, 0.0
    %v1386 = vmax.f32 %v1331, 0.0
    %v1387 = vmax.f32 %v1336, 0.0
    %v1388 = vld [vmem:[#allocation8] sm:$0xff]
    %v1389 = vld [vmem:[#allocation8 + $0x8] sm:$0xff]
    %v1390 = vld [vmem:[#allocation8 + $0x10] sm:$0xff]
    %v1391 = vld [vmem:[#allocation8 + $0x18] sm:$0xff]
    %v1392 = vld [vmem:[#allocation8 + $0x20] sm:$0xff]
    %v1393 = vld [vmem:[#allocation8 + $0x28] sm:$0xff]
    %v1394 = vld [vmem:[#allocation8 + $0x30] sm:$0xff]
    %v1395 = vld [vmem:[#allocation8 + $0x38] sm:$0xff]
    %v1396 = vld [vmem:[#allocation8 + $0x40] sm:$0xff]
    %v1397 = vld [vmem:[#allocation8 + $0x48] sm:$0xff]
    %v1398 = vld [vmem:[#allocation8 + $0x50] sm:$0xff]
    %v1399 = vld [vmem:[#allocation8 + $0x58] sm:$0xff]
    %v1400 = vld [vmem:[#allocation8 + $0x60] sm:$0xff]
    %v1401 = vld [vmem:[#allocation8 + $0x68] sm:$0xff]
    %v1402 = vld [vmem:[#allocation8 + $0x70] sm:$0xff]
    %v1403 = vld [vmem:[#allocation8 + $0x78] sm:$0xff]
    %v1404 = vld [vmem:[#allocation8 + $0x80] sm:$0xff]
    %v1405 = vld [vmem:[#allocation8 + $0x88] sm:$0xff]
    %v1406 = vld [vmem:[#allocation8 + $0x90] sm:$0xff]
    %v1407 = vld [vmem:[#allocation8 + $0x98] sm:$0xff]
    %v1408 = vld [vmem:[#allocation8 + $0xa0] sm:$0xff]
    %v1409 = vld [vmem:[#allocation8 + $0xa8] sm:$0xff]
    %v1410 = vld [vmem:[#allocation8 + $0xb0] sm:$0xff]
    %v1411 = vld [vmem:[#allocation8 + $0xb8] sm:$0xff]
    %v1412 = vld [vmem:[#allocation8 + $0xc0] sm:$0xff]
    %v1413 = vld [vmem:[#allocation8 + $0xc8] sm:$0xff]
    %v1414 = vld [vmem:[#allocation8 + $0xd0] sm:$0xff]
    %v1415 = vld [vmem:[#allocation8 + $0xd8] sm:$0xff]
    %v1416 = vld [vmem:[#allocation8 + $0xe0] sm:$0xff]
    %v1417 = vld [vmem:[#allocation8 + $0xe8] sm:$0xff]
    %v1418 = vld [vmem:[#allocation8 + $0xf0] sm:$0xff]
    %v1419 = vld [vmem:[#allocation8 + $0xf8] sm:$0xff]
    %v1420 = vld [vmem:[#allocation8 + $0x100] sm:$0xff]
    %v1421 = vld [vmem:[#allocation8 + $0x108] sm:$0xff]
    %v1422 = vld [vmem:[#allocation8 + $0x110] sm:$0xff]
    %v1423 = vld [vmem:[#allocation8 + $0x118] sm:$0xff]
    %v1424 = vld [vmem:[#allocation8 + $0x120] sm:$0xff]
    %v1425 = vld [vmem:[#allocation8 + $0x128] sm:$0xff]
    %v1426 = vld [vmem:[#allocation8 + $0x130] sm:$0xff]
    %v1427 = vld [vmem:[#allocation8 + $0x138] sm:$0xff]
    %v1428 = vld [vmem:[#allocation8 + $0x140] sm:$0xff]
    %v1429 = vld [vmem:[#allocation8 + $0x148] sm:$0xff]
    %v1430 = vld [vmem:[#allocation8 + $0x150] sm:$0xff]
    %v1431 = vld [vmem:[#allocation8 + $0x158] sm:$0xff]
    %v1432 = vld [vmem:[#allocation8 + $0x160] sm:$0xff]
    %v1433 = vld [vmem:[#allocation8 + $0x168] sm:$0xff]
    %v1434 = vld [vmem:[#allocation8 + $0x170] sm:$0xff]
    %v1435 = vld [vmem:[#allocation8 + $0x178] sm:$0xff]
    %v1436 = vld [vmem:[#allocation8 + $0x180] sm:$0xff]
    %1437 = vmatprep.subr.mxu0 0.0
    %1438 = vmatpush1.msra.mxu0 %v107
    %1439 = vmatprep.subr.mxu0 0.0
    %1440 = vmatpush1.msra.mxu0 %v106
    %1441 = vmatprep.subr.mxu0 0.0
    %1442 = vmatpush1.msra.mxu0 %v105
    %1443 = vmatprep.subr.mxu0 0.0
    %1444 = vmatpush1.msra.mxu0 %v104
    %1445 = vmatprep.subr.mxu0 0.0
    %1446 = vmatpush1.msra.mxu0 %v103
    %1447 = vmatprep.subr.mxu0 0.0
    %1448 = vmatpush1.msra.mxu0 %v102
    %1449 = vmatprep.subr.mxu0 0.0
    %1450 = vmatpush1.msra.mxu0 %v101
    %1451 = vmatprep.subr.mxu0 0.0
    %1452 = vmatpush1.msra.mxu0 %v100
    %1453 = vmatprep.subr.mxu0 0.0
    %1454 = vmatpush1.msra.mxu0 %v99
    %1455 = vmatprep.subr.mxu0 0.0
    %1456 = vmatpush1.msra.mxu0 %v98
    %1457 = vmatprep.subr.mxu0 0.0
    %1458 = vmatpush1.msra.mxu0 %v97
    %1459 = vmatprep.subr.mxu0 0.0
    %1460 = vmatpush1.msra.mxu0 %v96
    %1461 = vmatprep.subr.mxu0 0.0
    %1462 = vmatpush1.msra.mxu0 %v95
    %1463 = vmatprep.subr.mxu0 0.0
    %1464 = vmatpush1.msra.mxu0 %v94
    %1465 = vmatprep.subr.mxu0 0.0
    %1466 = vmatpush1.msra.mxu0 %v93
    %1467 = vmatprep.subr.mxu0 0.0
    %1468 = vmatpush1.msra.mxu0 %v92
    %1469 = vmatprep.subr.mxu0 0.0
    %1470 = vmatpush2.msra.mxu0 0.0
    %1471 = vmatprep.subr.mxu0 0.0
    %1472 = vmatpush2.msra.mxu0 0.0
    %1473 = vmatprep.subr.mxu0 0.0
    %1474 = vmatpush2.msra.mxu0 0.0
    %1475 = vmatprep.subr.mxu0 0.0
    %1476 = vmatpush2.msra.mxu0 0.0
    %1477 = vmatprep.subr.mxu0 0.0
    %1478 = vmatpush2.msra.mxu0 0.0
    %1479 = vmatprep.subr.mxu0 0.0
    %1480 = vmatpush2.msra.mxu0 0.0
    %1481 = vmatprep.subr.mxu0 0.0
    %1482 = vmatpush2.msra.mxu0 0.0
    %1483 = vmatprep.subr.mxu0 0.0
    %1484 = vmatpush2.msra.mxu0 0.0
    %1485 = vmatprep.subr.mxu0 0.0
    %1486 = vmatpush2.msra.mxu0 0.0
    %1487 = vmatprep.subr.mxu0 0.0
    %1488 = vmatpush2.msra.mxu0 0.0
    %1489 = vmatprep.subr.mxu0 0.0
    %1490 = vmatpush2.msra.mxu0 0.0
    %1491 = vmatprep.subr.mxu0 0.0
    %1492 = vmatpush2.msra.mxu0 0.0
    %1493 = vmatprep.subr.mxu0 0.0
    %1494 = vmatpush2.msra.mxu0 0.0
    %1495 = vmatprep.subr.mxu0 0.0
    %1496 = vmatpush2.msra.mxu0 0.0
    %1497 = vmatprep.subr.mxu0 0.0
    %1498 = vmatpush2.msra.mxu0 0.0
    %1499 = vmatprep.subr.mxu0 0.0
    %1500 = vmatpush2.msra.mxu0 0.0
    %1501 = vmatprep.mubr.f32.mxu0 0.0
    %1502 = vmatmul.mubr.f32.gmra.mxu0 %v1388
    %v1503 = vpop.f32.mrf.mxu0
    %v1504 = vadd.f32 %v162, %v1503
    %v1505 = vpop.f32.mrf.mxu0
    %1506 = vmatprep.mubr.f32.mxu0 0.0
    %1507 = vmatmul.mubr.f32.gmra.mxu0 %v1389
    %v1508 = vpop.f32.mrf.mxu0
    %v1509 = vadd.f32 %v162, %v1508
    %v1510 = vpop.f32.mrf.mxu0
    %1511 = vmatprep.mubr.f32.mxu0 0.0
    %1512 = vmatmul.mubr.f32.gmra.mxu0 %v1390
    %v1513 = vpop.f32.mrf.mxu0
    %v1514 = vadd.f32 %v162, %v1513
    %v1515 = vpop.f32.mrf.mxu0
    %1516 = vmatprep.mubr.f32.mxu0 0.0
    %1517 = vmatmul.mubr.f32.gmra.mxu0 %v1391
    %v1518 = vpop.f32.mrf.mxu0
    %v1519 = vadd.f32 %v162, %v1518
    %v1520 = vpop.f32.mrf.mxu0
    %1521 = vmatprep.mubr.f32.mxu0 0.0
    %1522 = vmatmul.mubr.f32.gmra.mxu0 %v1392
    %v1523 = vpop.f32.mrf.mxu0
    %v1524 = vadd.f32 %v162, %v1523
    %v1525 = vpop.f32.mrf.mxu0
    %1526 = vmatprep.mubr.f32.mxu0 0.0
    %1527 = vmatmul.mubr.f32.gmra.mxu0 %v1393
    %v1528 = vpop.f32.mrf.mxu0
    %v1529 = vadd.f32 %v162, %v1528
    %v1530 = vpop.f32.mrf.mxu0
    %1531 = vmatprep.mubr.f32.mxu0 0.0
    %1532 = vmatmul.mubr.f32.gmra.mxu0 %v1394
    %v1533 = vpop.f32.mrf.mxu0
    %v1534 = vadd.f32 %v162, %v1533
    %v1535 = vpop.f32.mrf.mxu0
    %1536 = vmatprep.mubr.f32.mxu0 0.0
    %1537 = vmatmul.mubr.f32.gmra.mxu0 %v1395
    %v1538 = vpop.f32.mrf.mxu0
    %v1539 = vadd.f32 %v162, %v1538
    %v1540 = vpop.f32.mrf.mxu0
    %1541 = vmatprep.mubr.f32.mxu0 0.0
    %1542 = vmatmul.mubr.f32.gmra.mxu0 %v1396
    %v1543 = vpop.f32.mrf.mxu0
    %v1544 = vadd.f32 %v162, %v1543
    %v1545 = vpop.f32.mrf.mxu0
    %1546 = vmatprep.mubr.f32.mxu0 0.0
    %1547 = vmatmul.mubr.f32.gmra.mxu0 %v1397
    %v1548 = vpop.f32.mrf.mxu0
    %v1549 = vadd.f32 %v162, %v1548
    %v1550 = vpop.f32.mrf.mxu0
    %1551 = vmatprep.mubr.f32.mxu0 0.0
    %1552 = vmatmul.mubr.f32.gmra.mxu0 %v1398
    %v1553 = vpop.f32.mrf.mxu0
    %v1554 = vadd.f32 %v162, %v1553
    %v1555 = vpop.f32.mrf.mxu0
    %1556 = vmatprep.mubr.f32.mxu0 0.0
    %1557 = vmatmul.mubr.f32.gmra.mxu0 %v1399
    %v1558 = vpop.f32.mrf.mxu0
    %v1559 = vadd.f32 %v162, %v1558
    %v1560 = vpop.f32.mrf.mxu0
    %1561 = vmatprep.mubr.f32.mxu0 0.0
    %1562 = vmatmul.mubr.f32.gmra.mxu0 %v1400
    %v1563 = vpop.f32.mrf.mxu0
    %v1564 = vadd.f32 %v162, %v1563
    %v1565 = vpop.f32.mrf.mxu0
    %1566 = vmatprep.mubr.f32.mxu0 0.0
    %1567 = vmatmul.mubr.f32.gmra.mxu0 %v1401
    %v1568 = vpop.f32.mrf.mxu0
    %v1569 = vadd.f32 %v162, %v1568
    %v1570 = vpop.f32.mrf.mxu0
    %1571 = vmatprep.mubr.f32.mxu0 0.0
    %1572 = vmatmul.mubr.f32.gmra.mxu0 %v1402
    %v1573 = vpop.f32.mrf.mxu0
    %v1574 = vadd.f32 %v162, %v1573
    %v1575 = vpop.f32.mrf.mxu0
    %1576 = vmatprep.mubr.f32.mxu0 0.0
    %1577 = vmatmul.mubr.f32.gmra.mxu0 %v1403
    %v1578 = vpop.f32.mrf.mxu0
    %v1579 = vadd.f32 %v162, %v1578
    %v1580 = vpop.f32.mrf.mxu0
    %1581 = vmatprep.mubr.f32.mxu0 0.0
    %1582 = vmatmul.mubr.f32.gmra.mxu0 %v1404
    %v1583 = vpop.f32.mrf.mxu0
    %v1584 = vadd.f32 %v162, %v1583
    %v1585 = vpop.f32.mrf.mxu0
    %1586 = vmatprep.mubr.f32.mxu0 0.0
    %1587 = vmatmul.mubr.f32.gmra.mxu0 %v1405
    %v1588 = vpop.f32.mrf.mxu0
    %v1589 = vadd.f32 %v162, %v1588
    %v1590 = vpop.f32.mrf.mxu0
    %1591 = vmatprep.mubr.f32.mxu0 0.0
    %1592 = vmatmul.mubr.f32.gmra.mxu0 %v1406
    %v1593 = vpop.f32.mrf.mxu0
    %v1594 = vadd.f32 %v162, %v1593
    %v1595 = vpop.f32.mrf.mxu0
    %1596 = vmatprep.mubr.f32.mxu0 0.0
    %1597 = vmatmul.mubr.f32.gmra.mxu0 %v1407
    %v1598 = vpop.f32.mrf.mxu0
    %v1599 = vadd.f32 %v162, %v1598
    %v1600 = vpop.f32.mrf.mxu0
    %1601 = vmatprep.mubr.f32.mxu0 0.0
    %1602 = vmatmul.mubr.f32.gmra.mxu0 %v1408
    %v1603 = vpop.f32.mrf.mxu0
    %v1604 = vadd.f32 %v162, %v1603
    %v1605 = vpop.f32.mrf.mxu0
    %1606 = vmatprep.mubr.f32.mxu0 0.0
    %1607 = vmatmul.mubr.f32.gmra.mxu0 %v1409
    %v1608 = vpop.f32.mrf.mxu0
    %v1609 = vadd.f32 %v162, %v1608
    %v1610 = vpop.f32.mrf.mxu0
    %1611 = vmatprep.mubr.f32.mxu0 0.0
    %1612 = vmatmul.mubr.f32.gmra.mxu0 %v1410
    %v1613 = vpop.f32.mrf.mxu0
    %v1614 = vadd.f32 %v162, %v1613
    %v1615 = vpop.f32.mrf.mxu0
    %1616 = vmatprep.mubr.f32.mxu0 0.0
    %1617 = vmatmul.mubr.f32.gmra.mxu0 %v1411
    %v1618 = vpop.f32.mrf.mxu0
    %v1619 = vadd.f32 %v162, %v1618
    %v1620 = vpop.f32.mrf.mxu0
    %1621 = vmatprep.mubr.f32.mxu0 0.0
    %1622 = vmatmul.mubr.f32.gmra.mxu0 %v1412
    %v1623 = vpop.f32.mrf.mxu0
    %v1624 = vadd.f32 %v162, %v1623
    %v1625 = vpop.f32.mrf.mxu0
    %1626 = vmatprep.mubr.f32.mxu0 0.0
    %1627 = vmatmul.mubr.f32.gmra.mxu0 %v1413
    %v1628 = vpop.f32.mrf.mxu0
    %v1629 = vadd.f32 %v162, %v1628
    %v1630 = vpop.f32.mrf.mxu0
    %1631 = vmatprep.mubr.f32.mxu0 0.0
    %1632 = vmatmul.mubr.f32.gmra.mxu0 %v1414
    %v1633 = vpop.f32.mrf.mxu0
    %v1634 = vadd.f32 %v162, %v1633
    %v1635 = vpop.f32.mrf.mxu0
    %1636 = vmatprep.mubr.f32.mxu0 0.0
    %1637 = vmatmul.mubr.f32.gmra.mxu0 %v1415
    %v1638 = vpop.f32.mrf.mxu0
    %v1639 = vadd.f32 %v162, %v1638
    %v1640 = vpop.f32.mrf.mxu0
    %1641 = vmatprep.mubr.f32.mxu0 0.0
    %1642 = vmatmul.mubr.f32.gmra.mxu0 %v1416
    %v1643 = vpop.f32.mrf.mxu0
    %v1644 = vadd.f32 %v162, %v1643
    %v1645 = vpop.f32.mrf.mxu0
    %1646 = vmatprep.mubr.f32.mxu0 0.0
    %1647 = vmatmul.mubr.f32.gmra.mxu0 %v1417
    %v1648 = vpop.f32.mrf.mxu0
    %v1649 = vadd.f32 %v162, %v1648
    %v1650 = vpop.f32.mrf.mxu0
    %1651 = vmatprep.mubr.f32.mxu0 0.0
    %1652 = vmatmul.mubr.f32.gmra.mxu0 %v1418
    %v1653 = vpop.f32.mrf.mxu0
    %v1654 = vadd.f32 %v162, %v1653
    %v1655 = vpop.f32.mrf.mxu0
    %1656 = vmatprep.mubr.f32.mxu0 0.0
    %1657 = vmatmul.mubr.f32.gmra.mxu0 %v1419
    %v1658 = vpop.f32.mrf.mxu0
    %v1659 = vadd.f32 %v162, %v1658
    %v1660 = vpop.f32.mrf.mxu0
    %1661 = vmatprep.mubr.f32.mxu0 0.0
    %1662 = vmatmul.mubr.f32.gmra.mxu0 %v1420
    %v1663 = vpop.f32.mrf.mxu0
    %v1664 = vadd.f32 %v162, %v1663
    %v1665 = vpop.f32.mrf.mxu0
    %1666 = vmatprep.mubr.f32.mxu0 0.0
    %1667 = vmatmul.mubr.f32.gmra.mxu0 %v1421
    %v1668 = vpop.f32.mrf.mxu0
    %v1669 = vadd.f32 %v162, %v1668
    %v1670 = vpop.f32.mrf.mxu0
    %1671 = vmatprep.mubr.f32.mxu0 0.0
    %1672 = vmatmul.mubr.f32.gmra.mxu0 %v1422
    %v1673 = vpop.f32.mrf.mxu0
    %v1674 = vadd.f32 %v162, %v1673
    %v1675 = vpop.f32.mrf.mxu0
    %1676 = vmatprep.mubr.f32.mxu0 0.0
    %1677 = vmatmul.mubr.f32.gmra.mxu0 %v1423
    %v1678 = vpop.f32.mrf.mxu0
    %v1679 = vadd.f32 %v162, %v1678
    %v1680 = vpop.f32.mrf.mxu0
    %1681 = vmatprep.mubr.f32.mxu0 0.0
    %1682 = vmatmul.mubr.f32.gmra.mxu0 %v1424
    %v1683 = vpop.f32.mrf.mxu0
    %v1684 = vadd.f32 %v162, %v1683
    %v1685 = vpop.f32.mrf.mxu0
    %1686 = vmatprep.mubr.f32.mxu0 0.0
    %1687 = vmatmul.mubr.f32.gmra.mxu0 %v1425
    %v1688 = vpop.f32.mrf.mxu0
    %v1689 = vadd.f32 %v162, %v1688
    %v1690 = vpop.f32.mrf.mxu0
    %1691 = vmatprep.mubr.f32.mxu0 0.0
    %1692 = vmatmul.mubr.f32.gmra.mxu0 %v1426
    %v1693 = vpop.f32.mrf.mxu0
    %v1694 = vadd.f32 %v162, %v1693
    %v1695 = vpop.f32.mrf.mxu0
    %1696 = vmatprep.mubr.f32.mxu0 0.0
    %1697 = vmatmul.mubr.f32.gmra.mxu0 %v1427
    %v1698 = vpop.f32.mrf.mxu0
    %v1699 = vadd.f32 %v162, %v1698
    %v1700 = vpop.f32.mrf.mxu0
    %1701 = vmatprep.mubr.f32.mxu0 0.0
    %1702 = vmatmul.mubr.f32.gmra.mxu0 %v1428
    %v1703 = vpop.f32.mrf.mxu0
    %v1704 = vadd.f32 %v162, %v1703
    %v1705 = vpop.f32.mrf.mxu0
    %1706 = vmatprep.mubr.f32.mxu0 0.0
    %1707 = vmatmul.mubr.f32.gmra.mxu0 %v1429
    %v1708 = vpop.f32.mrf.mxu0
    %v1709 = vadd.f32 %v162, %v1708
    %v1710 = vpop.f32.mrf.mxu0
    %1711 = vmatprep.mubr.f32.mxu0 0.0
    %1712 = vmatmul.mubr.f32.gmra.mxu0 %v1430
    %v1713 = vpop.f32.mrf.mxu0
    %v1714 = vadd.f32 %v162, %v1713
    %v1715 = vpop.f32.mrf.mxu0
    %1716 = vmatprep.mubr.f32.mxu0 0.0
    %1717 = vmatmul.mubr.f32.gmra.mxu0 %v1431
    %v1718 = vpop.f32.mrf.mxu0
    %v1719 = vadd.f32 %v162, %v1718
    %v1720 = vpop.f32.mrf.mxu0
    %1721 = vmatprep.mubr.f32.mxu0 0.0
    %1722 = vmatmul.mubr.f32.gmra.mxu0 %v1432
    %v1723 = vpop.f32.mrf.mxu0
    %v1724 = vadd.f32 %v162, %v1723
    %v1725 = vpop.f32.mrf.mxu0
    %1726 = vmatprep.mubr.f32.mxu0 0.0
    %1727 = vmatmul.mubr.f32.gmra.mxu0 %v1433
    %v1728 = vpop.f32.mrf.mxu0
    %v1729 = vadd.f32 %v162, %v1728
    %v1730 = vpop.f32.mrf.mxu0
    %1731 = vmatprep.mubr.f32.mxu0 0.0
    %1732 = vmatmul.mubr.f32.gmra.mxu0 %v1434
    %v1733 = vpop.f32.mrf.mxu0
    %v1734 = vadd.f32 %v162, %v1733
    %v1735 = vpop.f32.mrf.mxu0
    %1736 = vmatprep.mubr.f32.mxu0 0.0
    %1737 = vmatmul.mubr.f32.gmra.mxu0 %v1435
    %v1738 = vpop.f32.mrf.mxu0
    %v1739 = vadd.f32 %v162, %v1738
    %v1740 = vpop.f32.mrf.mxu0
    %1741 = vmatprep.mubr.f32.mxu0 0.0
    %1742 = vmatmul.mubr.f32.gmra.mxu0 %v1436
    %v1743 = vpop.f32.mrf.mxu0
    %v1744 = vadd.f32 %v162, %v1743
    %v1745 = vpop.f32.mrf.mxu0
    %1746 = vdwg.mxu0
    %v1747 = vmax.f32 %v1504, 0.0
    %v1748 = vmax.f32 %v1509, 0.0
    %v1749 = vmax.f32 %v1514, 0.0
    %v1750 = vmax.f32 %v1519, 0.0
    %v1751 = vmax.f32 %v1524, 0.0
    %v1752 = vmax.f32 %v1529, 0.0
    %v1753 = vmax.f32 %v1534, 0.0
    %v1754 = vmax.f32 %v1539, 0.0
    %v1755 = vmax.f32 %v1544, 0.0
    %v1756 = vmax.f32 %v1549, 0.0
    %v1757 = vmax.f32 %v1554, 0.0
    %v1758 = vmax.f32 %v1559, 0.0
    %v1759 = vmax.f32 %v1564, 0.0
    %v1760 = vmax.f32 %v1569, 0.0
    %v1761 = vmax.f32 %v1574, 0.0
    %v1762 = vmax.f32 %v1579, 0.0
    %v1763 = vmax.f32 %v1584, 0.0
    %v1764 = vmax.f32 %v1589, 0.0
    %v1765 = vmax.f32 %v1594, 0.0
    %v1766 = vmax.f32 %v1599, 0.0
    %v1767 = vmax.f32 %v1604, 0.0
    %v1768 = vmax.f32 %v1609, 0.0
    %v1769 = vmax.f32 %v1614, 0.0
    %v1770 = vmax.f32 %v1619, 0.0
    %v1771 = vmax.f32 %v1624, 0.0
    %v1772 = vmax.f32 %v1629, 0.0
    %v1773 = vmax.f32 %v1634, 0.0
    %v1774 = vmax.f32 %v1639, 0.0
    %v1775 = vmax.f32 %v1644, 0.0
    %v1776 = vmax.f32 %v1649, 0.0
    %v1777 = vmax.f32 %v1654, 0.0
    %v1778 = vmax.f32 %v1659, 0.0
    %v1779 = vmax.f32 %v1664, 0.0
    %v1780 = vmax.f32 %v1669, 0.0
    %v1781 = vmax.f32 %v1674, 0.0
    %v1782 = vmax.f32 %v1679, 0.0
    %v1783 = vmax.f32 %v1684, 0.0
    %v1784 = vmax.f32 %v1689, 0.0
    %v1785 = vmax.f32 %v1694, 0.0
    %v1786 = vmax.f32 %v1699, 0.0
    %v1787 = vmax.f32 %v1704, 0.0
    %v1788 = vmax.f32 %v1709, 0.0
    %v1789 = vmax.f32 %v1714, 0.0
    %v1790 = vmax.f32 %v1719, 0.0
    %v1791 = vmax.f32 %v1724, 0.0
    %v1792 = vmax.f32 %v1729, 0.0
    %v1793 = vmax.f32 %v1734, 0.0
    %v1794 = vmax.f32 %v1739, 0.0
    %v1795 = vmax.f32 %v1744, 0.0
    %v1796 = vmax.f32 %v1339, %v1747
    %v1797 = vmax.f32 %v1340, %v1748
    %v1798 = vmax.f32 %v1341, %v1749
    %v1799 = vmax.f32 %v1342, %v1750
    %v1800 = vmax.f32 %v1343, %v1751
    %v1801 = vmax.f32 %v1344, %v1752
    %v1802 = vmax.f32 %v1345, %v1753
    %v1803 = vmax.f32 %v1346, %v1754
    %v1804 = vmax.f32 %v1347, %v1755
    %v1805 = vmax.f32 %v1348, %v1756
    %v1806 = vmax.f32 %v1349, %v1757
    %v1807 = vmax.f32 %v1350, %v1758
    %v1808 = vmax.f32 %v1351, %v1759
    %v1809 = vmax.f32 %v1352, %v1760
    %v1810 = vmax.f32 %v1353, %v1761
    %v1811 = vmax.f32 %v1354, %v1762
    %v1812 = vmax.f32 %v1355, %v1763
    %v1813 = vmax.f32 %v1356, %v1764
    %v1814 = vmax.f32 %v1357, %v1765
    %v1815 = vmax.f32 %v1358, %v1766
    %v1816 = vmax.f32 %v1359, %v1767
    %v1817 = vmax.f32 %v1360, %v1768
    %v1818 = vmax.f32 %v1361, %v1769
    %v1819 = vmax.f32 %v1362, %v1770
    %v1820 = vmax.f32 %v1363, %v1771
    %v1821 = vmax.f32 %v1364, %v1772
    %v1822 = vmax.f32 %v1365, %v1773
    %v1823 = vmax.f32 %v1366, %v1774
    %v1824 = vmax.f32 %v1367, %v1775
    %v1825 = vmax.f32 %v1368, %v1776
    %v1826 = vmax.f32 %v1369, %v1777
    %v1827 = vmax.f32 %v1370, %v1778
    %v1828 = vmax.f32 %v1371, %v1779
    %v1829 = vmax.f32 %v1372, %v1780
    %v1830 = vmax.f32 %v1373, %v1781
    %v1831 = vmax.f32 %v1374, %v1782
    %v1832 = vmax.f32 %v1375, %v1783
    %v1833 = vmax.f32 %v1376, %v1784
    %v1834 = vmax.f32 %v1377, %v1785
    %v1835 = vmax.f32 %v1378, %v1786
    %v1836 = vmax.f32 %v1379, %v1787
    %v1837 = vmax.f32 %v1380, %v1788
    %v1838 = vmax.f32 %v1381, %v1789
    %v1839 = vmax.f32 %v1382, %v1790
    %v1840 = vmax.f32 %v1383, %v1791
    %v1841 = vmax.f32 %v1384, %v1792
    %v1842 = vmax.f32 %v1385, %v1793
    %v1843 = vmax.f32 %v1386, %v1794
    %v1844 = vmax.f32 %v1387, %v1795
    %v1845 = vmax.f32 %v931, %v1796
    %v1846 = vmax.f32 %v932, %v1797
    %v1847 = vmax.f32 %v933, %v1798
    %v1848 = vmax.f32 %v934, %v1799
    %v1849 = vmax.f32 %v935, %v1800
    %v1850 = vmax.f32 %v936, %v1801
    %v1851 = vmax.f32 %v937, %v1802
    %v1852 = vmax.f32 %v938, %v1803
    %v1853 = vmax.f32 %v939, %v1804
    %v1854 = vmax.f32 %v940, %v1805
    %v1855 = vmax.f32 %v941, %v1806
    %v1856 = vmax.f32 %v942, %v1807
    %v1857 = vmax.f32 %v943, %v1808
    %v1858 = vmax.f32 %v944, %v1809
    %v1859 = vmax.f32 %v945, %v1810
    %v1860 = vmax.f32 %v946, %v1811
    %v1861 = vmax.f32 %v947, %v1812
    %v1862 = vmax.f32 %v948, %v1813
    %v1863 = vmax.f32 %v949, %v1814
    %v1864 = vmax.f32 %v950, %v1815
    %v1865 = vmax.f32 %v951, %v1816
    %v1866 = vmax.f32 %v952, %v1817
    %v1867 = vmax.f32 %v953, %v1818
    %v1868 = vmax.f32 %v954, %v1819
    %v1869 = vmax.f32 %v955, %v1820
    %v1870 = vmax.f32 %v956, %v1821
    %v1871 = vmax.f32 %v957, %v1822
    %v1872 = vmax.f32 %v958, %v1823
    %v1873 = vmax.f32 %v959, %v1824
    %v1874 = vmax.f32 %v960, %v1825
    %v1875 = vmax.f32 %v961, %v1826
    %v1876 = vmax.f32 %v962, %v1827
    %v1877 = vmax.f32 %v963, %v1828
    %v1878 = vmax.f32 %v964, %v1829
    %v1879 = vmax.f32 %v965, %v1830
    %v1880 = vmax.f32 %v966, %v1831
    %v1881 = vmax.f32 %v967, %v1832
    %v1882 = vmax.f32 %v968, %v1833
    %v1883 = vmax.f32 %v969, %v1834
    %v1884 = vmax.f32 %v970, %v1835
    %v1885 = vmax.f32 %v971, %v1836
    %v1886 = vmax.f32 %v972, %v1837
    %v1887 = vmax.f32 %v973, %v1838
    %v1888 = vmax.f32 %v974, %v1839
    %v1889 = vmax.f32 %v975, %v1840
    %v1890 = vmax.f32 %v976, %v1841
    %v1891 = vmax.f32 %v977, %v1842
    %v1892 = vmax.f32 %v978, %v1843
    %v1893 = vmax.f32 %v979, %v1844
    %1894 = vst [vmem:[#allocation11] sm:$0xff] %v1845
    %1895 = vst [vmem:[#allocation11 + $0x8] sm:$0xff] %v1846
    %1896 = vst [vmem:[#allocation11 + $0x10] sm:$0xff] %v1847
    %1897 = vst [vmem:[#allocation11 + $0x18] sm:$0xff] %v1848
    %1898 = vst [vmem:[#allocation11 + $0x20] sm:$0xff] %v1849
    %1899 = vst [vmem:[#allocation11 + $0x28] sm:$0xff] %v1850
    %1900 = vst [vmem:[#allocation11 + $0x30] sm:$0xff] %v1851
    %1901 = vst [vmem:[#allocation11 + $0x38] sm:$0xff] %v1852
    %1902 = vst [vmem:[#allocation11 + $0x40] sm:$0xff] %v1853
    %1903 = vst [vmem:[#allocation11 + $0x48] sm:$0xff] %v1854
    %1904 = vst [vmem:[#allocation11 + $0x50] sm:$0xff] %v1855
    %1905 = vst [vmem:[#allocation11 + $0x58] sm:$0xff] %v1856
    %1906 = vst [vmem:[#allocation11 + $0x60] sm:$0xff] %v1857
    %1907 = vst [vmem:[#allocation11 + $0x68] sm:$0xff] %v1858
    %1908 = vst [vmem:[#allocation11 + $0x70] sm:$0xff] %v1859
    %1909 = vst [vmem:[#allocation11 + $0x78] sm:$0xff] %v1860
    %1910 = vst [vmem:[#allocation11 + $0x80] sm:$0xff] %v1861
    %1911 = vst [vmem:[#allocation11 + $0x88] sm:$0xff] %v1862
    %1912 = vst [vmem:[#allocation11 + $0x90] sm:$0xff] %v1863
    %1913 = vst [vmem:[#allocation11 + $0x98] sm:$0xff] %v1864
    %1914 = vst [vmem:[#allocation11 + $0xa0] sm:$0xff] %v1865
    %1915 = vst [vmem:[#allocation11 + $0xa8] sm:$0xff] %v1866
    %1916 = vst [vmem:[#allocation11 + $0xb0] sm:$0xff] %v1867
    %1917 = vst [vmem:[#allocation11 + $0xb8] sm:$0xff] %v1868
    %1918 = vst [vmem:[#allocation11 + $0xc0] sm:$0xff] %v1869
    %1919 = vst [vmem:[#allocation11 + $0xc8] sm:$0xff] %v1870
    %1920 = vst [vmem:[#allocation11 + $0xd0] sm:$0xff] %v1871
    %1921 = vst [vmem:[#allocation11 + $0xd8] sm:$0xff] %v1872
    %1922 = vst [vmem:[#allocation11 + $0xe0] sm:$0xff] %v1873
    %1923 = vst [vmem:[#allocation11 + $0xe8] sm:$0xff] %v1874
    %1924 = vst [vmem:[#allocation11 + $0xf0] sm:$0xff] %v1875
    %1925 = vst [vmem:[#allocation11 + $0xf8] sm:$0xff] %v1876
    %1926 = vst [vmem:[#allocation11 + $0x100] sm:$0xff] %v1877
    %1927 = vst [vmem:[#allocation11 + $0x108] sm:$0xff] %v1878
    %1928 = vst [vmem:[#allocation11 + $0x110] sm:$0xff] %v1879
    %1929 = vst [vmem:[#allocation11 + $0x118] sm:$0xff] %v1880
    %1930 = vst [vmem:[#allocation11 + $0x120] sm:$0xff] %v1881
    %1931 = vst [vmem:[#allocation11 + $0x128] sm:$0xff] %v1882
    %1932 = vst [vmem:[#allocation11 + $0x130] sm:$0xff] %v1883
    %1933 = vst [vmem:[#allocation11 + $0x138] sm:$0xff] %v1884
    %1934 = vst [vmem:[#allocation11 + $0x140] sm:$0xff] %v1885
    %1935 = vst [vmem:[#allocation11 + $0x148] sm:$0xff] %v1886
    %1936 = vst [vmem:[#allocation11 + $0x150] sm:$0xff] %v1887
    %1937 = vst [vmem:[#allocation11 + $0x158] sm:$0xff] %v1888
    %1938 = vst [vmem:[#allocation11 + $0x160] sm:$0xff] %v1889
    %1939 = vst [vmem:[#allocation11 + $0x168] sm:$0xff] %v1890
    %1940 = vst [vmem:[#allocation11 + $0x170] sm:$0xff] %v1891
    %1941 = vst [vmem:[#allocation11 + $0x178] sm:$0xff] %v1892
    %1942 = vst [vmem:[#allocation11 + $0x180] sm:$0xff] %v1893
    // Predicated region
    $region46: #{tpu_custom_call.1} parent=1 // pred_check
      _
    $region47: #{tpu_custom_call.1} parent=1 // pred_check_branch
      %1944 = sbr.rel (0) target = $region49
    $region48: #{tpu_custom_call.1} parent=1 // pred_region
      %s1946 = ssub.s32 6272, 6272
      %1947 = vsyncadd [#allocation4], %s1946
      %s1948 = sshll.u32 [#allocation11], 4
      %s1949 = int_to_ptr.vmem [resolvable:$true] %s1948
      %1954 = dma.vmem_to_hbm [thread:$0]  %s1949, 6272, %s6, [#allocation4], 128, 128, 8
    $region49: #{tpu_custom_call.1} parent=1 // pred_fallthru
      _
    // Predicated region
    $region50: #{tpu_custom_call.1} parent=1 // pred_check
      _
    $region51: #{tpu_custom_call.1} parent=1 // pred_check_branch
      %1956 = sbr.rel (0) target = $region53
    $region52: #{tpu_custom_call.1} parent=1 // pred_region
      %1957 = dma.done [#allocation4], 6272
    $region53: #{tpu_custom_call.1} parent=1 // pred_fallthru
      _
    %1958 = vsyncpa [#allocation3], 1
    %1959 = vsyncpa [#allocation6], 1
    %1960 = vsyncpa [#allocation9], 1
    %1961 = vsyncpa [#allocation4], 1

</llo_original>
